<compile_context>
chip_gen: v6e
topology: v6e:2x2x1
jax: 0.10.0
libtpu: 0.0.40
codegen_flags: <defaults>
</compile_context>

<pallas_src>
import jax
import jax.numpy as jnp
from jax import lax
from jax.experimental import pallas as pl
from jax.experimental.pallas import tpu as pltpu

BN_EPS = 1e-5


def _bn_affine(gamma, beta, mean, var):
    """Eval-mode BatchNorm2d folded to per-channel (scale, shift)."""
    scale = gamma / jnp.sqrt(var + BN_EPS)
    shift = beta - mean * scale
    return scale, shift


def _fold_params(params, Cin, Cout):
    """Exact reparameterization (eval-mode BN) of both MobileOneBlocks.

    Returns:
      w_dw : (9, Cin)    effective depthwise 3x3 taps, row k = ki*3 + kj
      b_dw : (1, Cin)    effective depthwise bias
      w_pw : (Cin, Cout) effective pointwise matrix (y @ w_pw)
      b_pw : (1, Cout)   effective pointwise bias
    """
    # ---- depthwise MobileOneBlock (groups = Cin, 3x3) ----
    sdw, bdw = _bn_affine(params["dw_kxk_gamma"], params["dw_kxk_beta"],
                          params["dw_kxk_mean"], params["dw_kxk_var"])   # (P, Cin)
    s1, b1 = _bn_affine(params["dw_1x1_gamma"], params["dw_1x1_beta"],
                        params["dw_1x1_mean"], params["dw_1x1_var"])     # (Cin,)
    sid, bid = _bn_affine(params["dw_id_gamma"], params["dw_id_beta"],
                          params["dw_id_mean"], params["dw_id_var"])     # (Cin,)

    wdw = params["dw_kxk_w"][:, :, 0]                                    # (P, Cin, 3, 3)
    w_dw = jnp.einsum("pc,pcij->ijc", sdw, wdw)                          # (3, 3, Cin)
    center = s1 * params["dw_1x1_w"][:, 0, 0, 0] + sid                   # 1x1 + identity
    w_dw = w_dw.at[1, 1, :].add(center)
    b_dw = bdw.sum(0) + b1 + bid                                         # (Cin,)

    # ---- pointwise MobileOneBlock (groups = 1, 1x1) ----
    spw, bpw = _bn_affine(params["pw_kxk_gamma"], params["pw_kxk_beta"],
                          params["pw_kxk_mean"], params["pw_kxk_var"])   # (P, Cout)
    wpw = params["pw_kxk_w"][:, :, :, 0, 0]                              # (P, Cout, Cin)
    w_pw = jnp.einsum("po,poc->co", spw, wpw)                            # (Cin, Cout)
    b_pw = bpw.sum(0)                                                    # (Cout,)
    if Cout == Cin:
        sidp, bidp = _bn_affine(params["pw_id_gamma"], params["pw_id_beta"],
                                params["pw_id_mean"], params["pw_id_var"])
        w_pw = w_pw + jnp.diag(sidp)
        b_pw = b_pw + bidp

    return (w_dw.reshape(9, Cin).astype(jnp.float32),
            b_dw.reshape(1, Cin).astype(jnp.float32),
            w_pw.astype(jnp.float32),
            b_pw.reshape(1, Cout).astype(jnp.float32))


def _make_kernel(H, W, Cin, use_nonlinear, matmul_dtype):
    KS = 3
    HW = H * W

    def kernel(xpad_ref,   # (1, H+2, W+2, Cin)  NHWC, spatially pre-padded
               wdw_ref,    # (9, Cin)            folded depthwise taps
               bdw_ref,    # (1, Cin)            folded depthwise bias
               wpw_ref,    # (Cin, TCout)        folded pointwise matrix tile
               bpw_ref,    # (1, TCout)          folded pointwise bias tile
               out_ref,    # (1, H*W, TCout)     lane-dense output tile
               ydw_ref):   # VMEM scratch (H*W, Cin), reused across Cout tiles
        # ---- depthwise 3x3 conv + bias + ReLU (only on the first Cout tile) ----
        @pl.when(pl.program_id(1) == 0)
        def _():
            w_all = wdw_ref[...]                              # (9, Cin)
            acc = jnp.zeros((1, H, W, Cin), jnp.float32)
            for k in range(KS * KS):
                ki, kj = divmod(k, KS)
                tap = xpad_ref[:, ki:ki + H, kj:kj + W, :]    # (1, H, W, Cin)
                acc = acc + tap * w_all[k].reshape(1, 1, 1, Cin)
            acc = acc + bdw_ref[...].reshape(1, 1, 1, Cin)
            ydw_ref[...] = jnp.maximum(acc, 0.0).reshape(HW, Cin)

        # ---- pointwise 1x1 conv as MXU matmul: (HW, Cin) @ (Cin, TCout) ----
        y = ydw_ref[...].astype(matmul_dtype)
        w = wpw_ref[...].astype(matmul_dtype)
        o = jnp.dot(y, w, preferred_element_type=jnp.float32)
        o = o + bpw_ref[...]                                  # (HW,TC) + (1,TC)
        if use_nonlinear:
            o = jnp.maximum(o, 0.0)
        out_ref[...] = o.reshape(1, HW, o.shape[-1]).astype(out_ref.dtype)

    return kernel


def mobileone_unit_pallas(x, params, *, parallel, use_nonlinear=True,
                          matmul_dtype=jnp.float32):
    """MobileOneUnit forward (NCHW in, NCHW out). `parallel` kept for API parity."""
    del parallel  # branch count is folded away in _fold_params
    N, Cin, H, W = x.shape
    Cout = params["pw_kxk_w"].shape[1]
    HW = H * W
    Hp, Wp = H + 2, W + 2

    # ---- glue: exact branch/BN folding + NHWC repack ----
    w_dw, b_dw, w_pw, b_pw = _fold_params(params, Cin, Cout)
    xpad = jnp.pad(x, ((0, 0), (0, 0), (1, 1), (1, 1)))
    x_nhwc = jnp.transpose(xpad, (0, 2, 3, 1))                # (N, Hp, Wp, Cin)

    # Cout tiling (multiple of 128 when possible; full Cout otherwise).
    if Cout % 256 == 0:
        t_cout = 256
    elif Cout % 128 == 0:
        t_cout = 128
    else:
        t_cout = Cout
    jt = Cout // t_cout

    # Conservative VMEM budget (double-buffered blocks + scratch), with headroom.
    def _pad_tile(rows, cols):
        return (-(-rows // 8) * 8) * (-(-cols // 128) * 128)
    est = 4 * (2 * Hp * _pad_tile(Wp, Cin)
               + 2 * (_pad_tile(9, Cin) + _pad_tile(1, Cin))
               + 2 * (_pad_tile(Cin, t_cout) + _pad_tile(1, t_cout))
               + 2 * _pad_tile(HW, t_cout)
               + _pad_tile(HW, Cin))
    vmem_limit = int(min(max(2 * est, 16 * 1024 * 1024), 48 * 1024 * 1024))

    kernel = _make_kernel(H, W, Cin, use_nonlinear, matmul_dtype)

    in_specs = [
        pl.BlockSpec((1, Hp, Wp, Cin), lambda n, j: (n, 0, 0, 0)),
        pl.BlockSpec((9, Cin), lambda n, j: (0, 0)),
        pl.BlockSpec((1, Cin), lambda n, j: (0, 0)),
        pl.BlockSpec((Cin, t_cout), lambda n, j: (0, j)),
        pl.BlockSpec((1, t_cout), lambda n, j: (0, j)),
    ]
    out_spec = pl.BlockSpec((1, HW, t_cout), lambda n, j: (n, 0, j))

    out_flat = pl.pallas_call(
        kernel,
        out_shape=jax.ShapeDtypeStruct((N, HW, Cout), x.dtype),
        grid=(N, jt),
        in_specs=in_specs,
        out_specs=out_spec,
        scratch_shapes=[pltpu.VMEM((HW, Cin), jnp.float32)],
        compiler_params=pltpu.CompilerParams(
            dimension_semantics=("parallel", "arbitrary"),
            vmem_limit_bytes=vmem_limit),
    )(x_nhwc, w_dw, b_dw, w_pw, b_pw)

    out = out_flat.reshape(N, H, W, Cout)
    return jnp.transpose(out, (0, 3, 1, 2))                   # back to NCHW


# ------------------------- deterministic parameter init -------------------------
def init_params(key, Cin, Cout, parallel):
    ks = jax.random.split(key, 15)
    p = {}
    p["dw_kxk_w"] = 0.2 * jax.random.normal(ks[0], (parallel, Cin, 1, 3, 3), jnp.float32)
    p["dw_kxk_gamma"] = 1.0 + 0.1 * jax.random.normal(ks[1], (parallel, Cin), jnp.float32)
    p["dw_kxk_beta"] = 0.1 * jax.random.normal(ks[2], (parallel, Cin), jnp.float32)
    p["dw_kxk_mean"] = 0.1 * jax.random.normal(ks[3], (parallel, Cin), jnp.float32)
    p["dw_kxk_var"] = jax.random.uniform(ks[4], (parallel, Cin), jnp.float32, 0.5, 1.5)
    p["dw_1x1_w"] = 0.2 * jax.random.normal(ks[5], (Cin, 1, 1, 1), jnp.float32)
    p["dw_1x1_gamma"] = 1.0 + 0.1 * jax.random.normal(ks[6], (Cin,), jnp.float32)
    p["dw_1x1_beta"] = 0.1 * jax.random.normal(ks[7], (Cin,), jnp.float32)
    p["dw_1x1_mean"] = 0.1 * jax.random.normal(ks[8], (Cin,), jnp.float32)
    p["dw_1x1_var"] = jax.random.uniform(ks[9], (Cin,), jnp.float32, 0.5, 1.5)
    p["dw_id_gamma"] = 1.0 + 0.1 * jax.random.normal(ks[10], (Cin,), jnp.float32)
    p["dw_id_beta"] = 0.1 * jax.random.normal(ks[11], (Cin,), jnp.float32)
    p["dw_id_mean"] = 0.1 * jax.random.normal(ks[12], (Cin,), jnp.float32)
    p["dw_id_var"] = jax.random.uniform(ks[13], (Cin,), jnp.float32, 0.5, 1.5)
    kpw = jax.random.split(ks[14], 6)
    p["pw_kxk_w"] = 0.2 * jax.random.normal(kpw[0], (parallel, Cout, Cin, 1, 1), jnp.float32)
    p["pw_kxk_gamma"] = 1.0 + 0.1 * jax.random.normal(kpw[1], (parallel, Cout), jnp.float32)
    p["pw_kxk_beta"] = 0.1 * jax.random.normal(kpw[2], (parallel, Cout), jnp.float32)
    p["pw_kxk_mean"] = 0.1 * jax.random.normal(kpw[3], (parallel, Cout), jnp.float32)
    p["pw_kxk_var"] = jax.random.uniform(kpw[4], (parallel, Cout), jnp.float32, 0.5, 1.5)
    if Cout == Cin:
        kid = jax.random.split(kpw[5], 4)
        p["pw_id_gamma"] = 1.0 + 0.1 * jax.random.normal(kid[0], (Cin,), jnp.float32)
        p["pw_id_beta"] = 0.1 * jax.random.normal(kid[1], (Cin,), jnp.float32)
        p["pw_id_mean"] = 0.1 * jax.random.normal(kid[2], (Cin,), jnp.float32)
        p["pw_id_var"] = jax.random.uniform(kid[3], (Cin,), jnp.float32, 0.5, 1.5)
    return p


# ------------------------- pure-JAX reference (unfolded, branch by branch) -------------------------
def _convbn_ref(x, w, gamma, beta, mean, var, groups, padding):
    y = lax.conv_general_dilated(
        x, w, window_strides=(1, 1), padding=padding,
        dimension_numbers=("NCHW", "OIHW", "NCHW"),
        feature_group_count=groups)
    scale, shift = _bn_affine(gamma, beta, mean, var)
    return y * scale[None, :, None, None] + shift[None, :, None, None]


def ref_forward(x, p, parallel, Cin, Cout, use_nonlinear=True):
    acc = jnp.zeros_like(x)
    for i in range(parallel):
        acc = acc + _convbn_ref(x, p["dw_kxk_w"][i], p["dw_kxk_gamma"][i],
                                p["dw_kxk_beta"][i], p["dw_kxk_mean"][i],
                                p["dw_kxk_var"][i], Cin, ((1, 1), (1, 1)))
    acc = acc + _convbn_ref(x, p["dw_1x1_w"], p["dw_1x1_gamma"], p["dw_1x1_beta"],
                            p["dw_1x1_mean"], p["dw_1x1_var"], Cin, ((0, 0), (0, 0)))
    sid, bid = _bn_affine(p["dw_id_gamma"], p["dw_id_beta"],
                          p["dw_id_mean"], p["dw_id_var"])
    acc = acc + x * sid[None, :, None, None] + bid[None, :, None, None]
    y = jnp.maximum(acc, 0.0)

    acc2 = 0.0
    for i in range(parallel):
        acc2 = acc2 + _convbn_ref(y, p["pw_kxk_w"][i], p["pw_kxk_gamma"][i],
                                  p["pw_kxk_beta"][i], p["pw_kxk_mean"][i],
                                  p["pw_kxk_var"][i], 1, ((0, 0), (0, 0)))
    if Cout == Cin:
        s, b = _bn_affine(p["pw_id_gamma"], p["pw_id_beta"],
                          p["pw_id_mean"], p["pw_id_var"])
        acc2 = acc2 + y * s[None, :, None, None] + b[None, :, None, None]
    return jnp.maximum(acc2, 0.0) if use_nonlinear else acc2


if __name__ == "__main__":
    N, Cin, Cout, H, W, PARALLEL = 2, 4, 8, 16, 16, 2
    key = jax.random.PRNGKey(0)
    kx, kp = jax.random.split(key)
    x = jax.random.normal(kx, (N, Cin, H, W), jnp.float32)
    params = init_params(kp, Cin, Cout, PARALLEL)

    # f32 matmul keeps the tight correctness tolerance; on v6e/v7x production
    # shapes pass matmul_dtype=jnp.bfloat16 for 2x MXU throughput.
    out = mobileone_unit_pallas(x, params, parallel=PARALLEL, use_nonlinear=True)
    out = jax.block_until_ready(out)

    ref = ref_forward(x, params, PARALLEL, Cin, Cout, use_nonlinear=True)
    assert out.shape == (N, Cout, H, W), out.shape
    max_err = float(jnp.max(jnp.abs(out - ref)))
    assert jnp.allclose(out, ref, atol=1e-4, rtol=1e-4), max_err
    print("KERNEL_OK")
</pallas_src>

<mosaic_0001>
module attributes {stable_mosaic.version = 11 : i64} {
  func.func @kernel(%arg0: i32, %arg1: i32, %arg2: memref<1x18x18x4xf32, #tpu.memory_space<vmem>>, %arg3: memref<9x4xf32, #tpu.memory_space<vmem>>, %arg4: memref<1x4xf32, #tpu.memory_space<vmem>>, %arg5: memref<4x8xf32, #tpu.memory_space<vmem>>, %arg6: memref<1x8xf32, #tpu.memory_space<vmem>>, %arg7: memref<1x256x8xf32, #tpu.memory_space<vmem>>, %arg8: memref<256x4xf32, #tpu.memory_space<vmem>>) attributes {dimension_semantics = [#tpu.dimension_semantics<parallel>, #tpu.dimension_semantics<arbitrary>], iteration_bounds = array<i64: 2, 1>, scalar_prefetch = 0 : i64, scratch_operands = 1 : i64, tpu.core_type = #tpu.core_type<tc>, window_params = [{transform_indices = @transform_0, window_bounds = array<i64: 1, 18, 18, 4>}, {pipeline_mode = #tpu.pipeline_mode<synchronous>, transform_indices = @transform_1, window_bounds = array<i64: 9, 4>}, {pipeline_mode = #tpu.pipeline_mode<synchronous>, transform_indices = @transform_2, window_bounds = array<i64: 1, 4>}, {transform_indices = @transform_3, window_bounds = array<i64: 4, 8>}, {transform_indices = @transform_4, window_bounds = array<i64: 1, 8>}, {transform_indices = @transform_5, window_bounds = array<i64: 1, 256, 8>}]} {
    %c0_i32 = arith.constant 0 : i32
    %0 = arith.cmpi eq, %arg1, %c0_i32 : i32
    %1 = arith.extui %0 : i1 to i32
    %c0_i32_0 = arith.constant 0 : i32
    %2 = arith.cmpi ne, %1, %c0_i32_0 : i32
    scf.if %2 {
      %c0_10 = arith.constant 0 : index
      %c0_11 = arith.constant 0 : index
      %13 = vector.load %arg3[%c0_10, %c0_11] : memref<9x4xf32, #tpu.memory_space<vmem>>, vector<9x4xf32>
      %cst_12 = arith.constant 0.000000e+00 : f32
      %14 = vector.broadcast %cst_12 : f32 to vector<1x16x16x4xf32>
      %c0_13 = arith.constant 0 : index
      %c0_14 = arith.constant 0 : index
      %c0_15 = arith.constant 0 : index
      %c0_16 = arith.constant 0 : index
      %15 = vector.load %arg2[%c0_13, %c0_14, %c0_15, %c0_16] : memref<1x18x18x4xf32, #tpu.memory_space<vmem>>, vector<1x16x16x4xf32>
      %16 = vector.extract_strided_slice %13 {offsets = [0, 0], sizes = [1, 4], strides = [1, 1]} : vector<9x4xf32> to vector<1x4xf32>
      %17 = vector.shape_cast %16 : vector<1x4xf32> to vector<4xf32>
      %18 = vector.shape_cast %17 : vector<4xf32> to vector<1x1x1x4xf32>
      %19 = vector.broadcast %18 : vector<1x1x1x4xf32> to vector<1x16x16x4xf32>
      %20 = arith.mulf %15, %19 : vector<1x16x16x4xf32>
      %21 = arith.addf %14, %20 : vector<1x16x16x4xf32>
      %c0_17 = arith.constant 0 : index
      %c0_18 = arith.constant 0 : index
      %c1 = arith.constant 1 : index
      %c0_19 = arith.constant 0 : index
      %22 = vector.load %arg2[%c0_17, %c0_18, %c1, %c0_19] : memref<1x18x18x4xf32, #tpu.memory_space<vmem>>, vector<1x16x16x4xf32>
      %23 = vector.extract_strided_slice %13 {offsets = [1, 0], sizes = [1, 4], strides = [1, 1]} : vector<9x4xf32> to vector<1x4xf32>
      %24 = vector.shape_cast %23 : vector<1x4xf32> to vector<4xf32>
      %25 = vector.shape_cast %24 : vector<4xf32> to vector<1x1x1x4xf32>
      %26 = vector.broadcast %25 : vector<1x1x1x4xf32> to vector<1x16x16x4xf32>
      %27 = arith.mulf %22, %26 : vector<1x16x16x4xf32>
      %28 = arith.addf %21, %27 : vector<1x16x16x4xf32>
      %c0_20 = arith.constant 0 : index
      %c0_21 = arith.constant 0 : index
      %c2 = arith.constant 2 : index
      %c0_22 = arith.constant 0 : index
      %29 = vector.load %arg2[%c0_20, %c0_21, %c2, %c0_22] : memref<1x18x18x4xf32, #tpu.memory_space<vmem>>, vector<1x16x16x4xf32>
      %30 = vector.extract_strided_slice %13 {offsets = [2, 0], sizes = [1, 4], strides = [1, 1]} : vector<9x4xf32> to vector<1x4xf32>
      %31 = vector.shape_cast %30 : vector<1x4xf32> to vector<4xf32>
      %32 = vector.shape_cast %31 : vector<4xf32> to vector<1x1x1x4xf32>
      %33 = vector.broadcast %32 : vector<1x1x1x4xf32> to vector<1x16x16x4xf32>
      %34 = arith.mulf %29, %33 : vector<1x16x16x4xf32>
      %35 = arith.addf %28, %34 : vector<1x16x16x4xf32>
      %c0_23 = arith.constant 0 : index
      %c1_24 = arith.constant 1 : index
      %c0_25 = arith.constant 0 : index
      %c0_26 = arith.constant 0 : index
      %36 = vector.load %arg2[%c0_23, %c1_24, %c0_25, %c0_26] : memref<1x18x18x4xf32, #tpu.memory_space<vmem>>, vector<1x16x16x4xf32>
      %37 = vector.extract_strided_slice %13 {offsets = [3, 0], sizes = [1, 4], strides = [1, 1]} : vector<9x4xf32> to vector<1x4xf32>
      %38 = vector.shape_cast %37 : vector<1x4xf32> to vector<4xf32>
      %39 = vector.shape_cast %38 : vector<4xf32> to vector<1x1x1x4xf32>
      %40 = vector.broadcast %39 : vector<1x1x1x4xf32> to vector<1x16x16x4xf32>
      %41 = arith.mulf %36, %40 : vector<1x16x16x4xf32>
      %42 = arith.addf %35, %41 : vector<1x16x16x4xf32>
      %c0_27 = arith.constant 0 : index
      %c1_28 = arith.constant 1 : index
      %c1_29 = arith.constant 1 : index
      %c0_30 = arith.constant 0 : index
      %43 = vector.load %arg2[%c0_27, %c1_28, %c1_29, %c0_30] : memref<1x18x18x4xf32, #tpu.memory_space<vmem>>, vector<1x16x16x4xf32>
      %44 = vector.extract_strided_slice %13 {offsets = [4, 0], sizes = [1, 4], strides = [1, 1]} : vector<9x4xf32> to vector<1x4xf32>
      %45 = vector.shape_cast %44 : vector<1x4xf32> to vector<4xf32>
      %46 = vector.shape_cast %45 : vector<4xf32> to vector<1x1x1x4xf32>
      %47 = vector.broadcast %46 : vector<1x1x1x4xf32> to vector<1x16x16x4xf32>
      %48 = arith.mulf %43, %47 : vector<1x16x16x4xf32>
      %49 = arith.addf %42, %48 : vector<1x16x16x4xf32>
      %c0_31 = arith.constant 0 : index
      %c1_32 = arith.constant 1 : index
      %c2_33 = arith.constant 2 : index
      %c0_34 = arith.constant 0 : index
      %50 = vector.load %arg2[%c0_31, %c1_32, %c2_33, %c0_34] : memref<1x18x18x4xf32, #tpu.memory_space<vmem>>, vector<1x16x16x4xf32>
      %51 = vector.extract_strided_slice %13 {offsets = [5, 0], sizes = [1, 4], strides = [1, 1]} : vector<9x4xf32> to vector<1x4xf32>
      %52 = vector.shape_cast %51 : vector<1x4xf32> to vector<4xf32>
      %53 = vector.shape_cast %52 : vector<4xf32> to vector<1x1x1x4xf32>
      %54 = vector.broadcast %53 : vector<1x1x1x4xf32> to vector<1x16x16x4xf32>
      %55 = arith.mulf %50, %54 : vector<1x16x16x4xf32>
      %56 = arith.addf %49, %55 : vector<1x16x16x4xf32>
      %c0_35 = arith.constant 0 : index
      %c2_36 = arith.constant 2 : index
      %c0_37 = arith.constant 0 : index
      %c0_38 = arith.constant 0 : index
      %57 = vector.load %arg2[%c0_35, %c2_36, %c0_37, %c0_38] : memref<1x18x18x4xf32, #tpu.memory_space<vmem>>, vector<1x16x16x4xf32>
      %58 = vector.extract_strided_slice %13 {offsets = [6, 0], sizes = [1, 4], strides = [1, 1]} : vector<9x4xf32> to vector<1x4xf32>
      %59 = vector.shape_cast %58 : vector<1x4xf32> to vector<4xf32>
      %60 = vector.shape_cast %59 : vector<4xf32> to vector<1x1x1x4xf32>
      %61 = vector.broadcast %60 : vector<1x1x1x4xf32> to vector<1x16x16x4xf32>
      %62 = arith.mulf %57, %61 : vector<1x16x16x4xf32>
      %63 = arith.addf %56, %62 : vector<1x16x16x4xf32>
      %c0_39 = arith.constant 0 : index
      %c2_40 = arith.constant 2 : index
      %c1_41 = arith.constant 1 : index
      %c0_42 = arith.constant 0 : index
      %64 = vector.load %arg2[%c0_39, %c2_40, %c1_41, %c0_42] : memref<1x18x18x4xf32, #tpu.memory_space<vmem>>, vector<1x16x16x4xf32>
      %65 = vector.extract_strided_slice %13 {offsets = [7, 0], sizes = [1, 4], strides = [1, 1]} : vector<9x4xf32> to vector<1x4xf32>
      %66 = vector.shape_cast %65 : vector<1x4xf32> to vector<4xf32>
      %67 = vector.shape_cast %66 : vector<4xf32> to vector<1x1x1x4xf32>
      %68 = vector.broadcast %67 : vector<1x1x1x4xf32> to vector<1x16x16x4xf32>
      %69 = arith.mulf %64, %68 : vector<1x16x16x4xf32>
      %70 = arith.addf %63, %69 : vector<1x16x16x4xf32>
      %c0_43 = arith.constant 0 : index
      %c2_44 = arith.constant 2 : index
      %c2_45 = arith.constant 2 : index
      %c0_46 = arith.constant 0 : index
      %71 = vector.load %arg2[%c0_43, %c2_44, %c2_45, %c0_46] : memref<1x18x18x4xf32, #tpu.memory_space<vmem>>, vector<1x16x16x4xf32>
      %72 = vector.extract_strided_slice %13 {offsets = [8, 0], sizes = [1, 4], strides = [1, 1]} : vector<9x4xf32> to vector<1x4xf32>
      %73 = vector.shape_cast %72 : vector<1x4xf32> to vector<4xf32>
      %74 = vector.shape_cast %73 : vector<4xf32> to vector<1x1x1x4xf32>
      %75 = vector.broadcast %74 : vector<1x1x1x4xf32> to vector<1x16x16x4xf32>
      %76 = arith.mulf %71, %75 : vector<1x16x16x4xf32>
      %77 = arith.addf %70, %76 : vector<1x16x16x4xf32>
      %c0_47 = arith.constant 0 : index
      %c0_48 = arith.constant 0 : index
      %78 = vector.load %arg4[%c0_47, %c0_48] : memref<1x4xf32, #tpu.memory_space<vmem>>, vector<1x4xf32>
      %79 = vector.shape_cast %78 : vector<1x4xf32> to vector<1x1x1x4xf32>
      %80 = vector.broadcast %79 : vector<1x1x1x4xf32> to vector<1x16x16x4xf32>
      %81 = arith.addf %77, %80 : vector<1x16x16x4xf32>
      %cst_49 = arith.constant 0.000000e+00 : f32
      %82 = vector.broadcast %cst_49 : f32 to vector<1x16x16x4xf32>
      %83 = arith.maximumf %81, %82 : vector<1x16x16x4xf32>
      %84 = vector.shape_cast %83 : vector<1x16x16x4xf32> to vector<256x4xf32>
      %c0_50 = arith.constant 0 : index
      %c0_51 = arith.constant 0 : index
      %85 = vector.load %arg8[%c0_50, %c0_51] : memref<256x4xf32, #tpu.memory_space<vmem>>, vector<256x4xf32>
      tpu.vector_store %arg8[%c0_50, %c0_51], %84 {strides = array<i32>} : memref<256x4xf32, #tpu.memory_space<vmem>>, vector<256x4xf32>,
    } else {
    }
    %c0 = arith.constant 0 : index
    %c0_1 = arith.constant 0 : index
    %3 = vector.load %arg8[%c0, %c0_1] : memref<256x4xf32, #tpu.memory_space<vmem>>, vector<256x4xf32>
    %c0_2 = arith.constant 0 : index
    %c0_3 = arith.constant 0 : index
    %4 = vector.load %arg5[%c0_2, %c0_3] : memref<4x8xf32, #tpu.memory_space<vmem>>, vector<4x8xf32>
    %cst = arith.constant dense<0.000000e+00> : vector<256x8xf32>
    %5 = tpu.matmul %3, %4, %cst {dimension_numbers = #tpu.dot_dimension_numbers<[1], [0], [0], [1], [0, 0, 1, 1], [], []>} : vector<256x4xf32>, vector<4x8xf32>, vector<256x8xf32> -> vector<256x8xf32>
    %c0_4 = arith.constant 0 : index
    %c0_5 = arith.constant 0 : index
    %6 = vector.load %arg6[%c0_4, %c0_5] : memref<1x8xf32, #tpu.memory_space<vmem>>, vector<1x8xf32>
    %7 = vector.broadcast %6 : vector<1x8xf32> to vector<256x8xf32>
    %8 = arith.addf %5, %7 : vector<256x8xf32>
    %cst_6 = arith.constant 0.000000e+00 : f32
    %9 = vector.broadcast %cst_6 : f32 to vector<256x8xf32>
    %10 = arith.maximumf %8, %9 : vector<256x8xf32>
    %11 = vector.shape_cast %10 : vector<256x8xf32> to vector<1x256x8xf32>
    %c0_7 = arith.constant 0 : index
    %c0_8 = arith.constant 0 : index
    %c0_9 = arith.constant 0 : index
    %12 = vector.load %arg7[%c0_7, %c0_8, %c0_9] : memref<1x256x8xf32, #tpu.memory_space<vmem>>, vector<1x256x8xf32>
    tpu.vector_store %arg7[%c0_7, %c0_8, %c0_9], %11 {strides = array<i32>} : memref<1x256x8xf32, #tpu.memory_space<vmem>>, vector<1x256x8xf32>,
    return
  }
  func.func @transform_0(%arg0: i32, %arg1: i32) -> (i32, i32, i32, i32) {
    %c0_i32 = arith.constant 0 : i32
    %c0_i32_0 = arith.constant 0 : i32
    %c0_i32_1 = arith.constant 0 : i32
    %c0_i32_2 = arith.constant 0 : i32
    return %arg0, %c0_i32, %c0_i32_0, %c0_i32_1 : i32, i32, i32, i32
  }
  func.func @transform_1(%arg0: i32, %arg1: i32) -> (i32, i32) {
    %c0_i32 = arith.constant 0 : i32
    %c0_i32_0 = arith.constant 0 : i32
    %c0_i32_1 = arith.constant 0 : i32
    return %c0_i32, %c0_i32_0 : i32, i32
  }
  func.func @transform_2(%arg0: i32, %arg1: i32) -> (i32, i32) {
    %c0_i32 = arith.constant 0 : i32
    %c0_i32_0 = arith.constant 0 : i32
    %c0_i32_1 = arith.constant 0 : i32
    return %c0_i32, %c0_i32_0 : i32, i32
  }
  func.func @transform_3(%arg0: i32, %arg1: i32) -> (i32, i32) {
    %c0_i32 = arith.constant 0 : i32
    %c0_i32_0 = arith.constant 0 : i32
    return %c0_i32, %arg1 : i32, i32
  }
  func.func @transform_4(%arg0: i32, %arg1: i32) -> (i32, i32) {
    %c0_i32 = arith.constant 0 : i32
    %c0_i32_0 = arith.constant 0 : i32
    return %c0_i32, %arg1 : i32, i32
  }
  func.func @transform_5(%arg0: i32, %arg1: i32) -> (i32, i32, i32) {
    %c0_i32 = arith.constant 0 : i32
    %c0_i32_0 = arith.constant 0 : i32
    return %arg0, %c0_i32, %arg1 : i32, i32, i32
  }
}

</mosaic_0001>

<llo_original>
// kernel: tpu_custom_call.1
$region0: #{tpu_custom_call.1}
  #allocation0 [shape = 'u32[]', space=smem, size = 0x4, offset = 0x4, fixed_abs, tag = 'smem constant byte address 0x4 - core index']
  #allocation1 [shape = 'u32[144,128]{1,0:T(1,128)}', space=vmem, size = 0x12000, scoped, tag = 'internal scratch']
  #allocation2 [shape = 'f32[256,4]{1,0:T(8,128)}', space=vmem, size = 0x20000, scoped, tag = 'scratch operand']
  %s0 = inlined_call_operand.vmem [shape: f32[2,18,18,4], index: 0, kind: input, shape index: {}]
  %s1 = inlined_call_operand.vmem [shape: f32[9,4], index: 1, kind: input, shape index: {}]
  %s2 = inlined_call_operand.vmem [shape: f32[1,4], index: 2, kind: input, shape index: {}]
  %s3 = inlined_call_operand.vmem [shape: f32[4,8], index: 3, kind: input, shape index: {}]
  %s4 = inlined_call_operand.vmem [shape: f32[1,8], index: 4, kind: input, shape index: {}]
  %s5 = inlined_call_operand.vmem [shape: f32[2,256,8], index: 5, kind: output, shape index: {}]
  %s6 = sld [smem:[#allocation0]]
  $region57: #{tpu_custom_call.1} parent=0
    _
  %s8 = ssub.s32 1, %s6
  %s9 = scalar_select 0, %s8, %s6
  loop: start=0, step=1, limit=4
  $region2: #{tpu_custom_call.1} parent=0 // loop_pre_header
    _
  $region3: #{tpu_custom_call.1} parent=0 // loop_header
    %s11 = sphi 0, %s15
    %p12 = scmp.ge.s32.totalorder %s11, 4
    %s18 = sphi 0, %s30
    %s19 = sphi 0, %s26
    %s20 = sphi 0, %s18
    %s21 = sphi 0, %s19
    %s22 = sphi 0, %s20
    %s23 = sphi 0, %s21
    %s33 = sphi 0, %s35
    %s36 = sphi 0, %s33
    %s37 = sphi 0, %s36
    %s53 = sphi 0, %s37
    %s57 = sphi 0, %s57
    %s59 = sphi 0, %s57
    %s60 = sphi 0, %s59
    %s74 = sphi 0, %s60
    %s78 = sphi 0, %s78
    %s80 = sphi 0, %s78
    %s81 = sphi 0, %s80
    %s95 = sphi 0, %s81
    %s101 = sphi 0, %s103
    %s104 = sphi 0, %s101
    %s105 = sphi 0, %s104
    %s121 = sphi 0, %s105
    %s127 = sphi 0, %s129
    %s130 = sphi 0, %s127
    %s131 = sphi 0, %s130
    %s147 = sphi 0, %s131
    %s155 = sphi 0, %s157
    %s158 = sphi 0, %s155
    %s159 = sphi 0, %s158
    %s175 = sphi 0, %s159
  $region4: #{tpu_custom_call.1} parent=0 // loop_header_branch
    %14 = sbr.rel (%p12) target = $region8
  $region5: #{tpu_custom_call.1} parent=0 // loop_body
    %s16 = ssub.s32 %s11, 1
    %s17 = ssub.s32 %s11, 2
    %s24 = sadd.s32 1, %s19
    %p25 = scmp.ge.s32.totalorder %s24, 1
    %s26 = scalar_select %p25, 0, %s24
    %s27 = sadd.s32 1, %s18
    %s28 = scalar_select %p25, %s27, %s18
    %p29 = scmp.ge.s32.totalorder %s28, 2
    %s30 = scalar_select %p29, 0, %s28
    %s31 = ssub.s32 %s18, %s30
    %p32 = scmp.eq.s32.totalorder %s31, 0
    %s34 = sadd.s32 %s33, 1
    %s35 = scalar_select %p32, %s33, %s34
    %p38 = pneg %p32
    %p39 = scmp.eq.s32.totalorder %s11, 1
    %p40 = por %p38, %p39
    %p41 = scmp.ne.s32.totalorder %s33, %s36
    %p42 = scmp.eq.s32.totalorder %s11, 0
    %p43 = por %p41, %p42
    %p44 = scmp.ne.s32.totalorder %s33, %s36
    %p45 = scmp.eq.s32.totalorder %s16, 1
    %p46 = por %p44, %p45
    %p47 = scmp.ne.s32.totalorder %s36, %s37
    %p48 = scmp.eq.s32.totalorder %s16, 0
    %p49 = por %p47, %p48
    %p50 = scmp.ne.s32.totalorder %s36, %s37
    %p51 = scmp.eq.s32.totalorder %s17, 1
    %p52 = por %p50, %p51
    %p54 = scmp.ne.s32.totalorder %s37, %s53
    %p55 = scmp.eq.s32.totalorder %s17, 0
    %p56 = por %p54, %p55
    %s58 = sadd.s32 %s57, 1
    %p61 = scmp.eq.s32.totalorder %s11, 1
    %p62 = scmp.ne.s32.totalorder %s57, %s59
    %p63 = scmp.eq.s32.totalorder %s11, 0
    %p64 = por %p62, %p63
    %p65 = scmp.ne.s32.totalorder %s57, %s59
    %p66 = scmp.eq.s32.totalorder %s16, 1
    %p67 = por %p65, %p66
    %p68 = scmp.ne.s32.totalorder %s59, %s60
    %p69 = scmp.eq.s32.totalorder %s16, 0
    %p70 = por %p68, %p69
    %p71 = scmp.ne.s32.totalorder %s59, %s60
    %p72 = scmp.eq.s32.totalorder %s17, 1
    %p73 = por %p71, %p72
    %p75 = scmp.ne.s32.totalorder %s60, %s74
    %p76 = scmp.eq.s32.totalorder %s17, 0
    %p77 = por %p75, %p76
    %s79 = sadd.s32 %s78, 1
    %p82 = scmp.eq.s32.totalorder %s11, 1
    %p83 = scmp.ne.s32.totalorder %s78, %s80
    %p84 = scmp.eq.s32.totalorder %s11, 0
    %p85 = por %p83, %p84
    %p86 = scmp.ne.s32.totalorder %s78, %s80
    %p87 = scmp.eq.s32.totalorder %s16, 1
    %p88 = por %p86, %p87
    %p89 = scmp.ne.s32.totalorder %s80, %s81
    %p90 = scmp.eq.s32.totalorder %s16, 0
    %p91 = por %p89, %p90
    %p92 = scmp.ne.s32.totalorder %s80, %s81
    %p93 = scmp.eq.s32.totalorder %s17, 1
    %p94 = por %p92, %p93
    %p96 = scmp.ne.s32.totalorder %s81, %s95
    %p97 = scmp.eq.s32.totalorder %s17, 0
    %p98 = por %p96, %p97
    %s99 = ssub.s32 %s19, %s26
    %p100 = scmp.eq.s32.totalorder %s99, 0
    %s102 = sadd.s32 %s101, 1
    %s103 = scalar_select %p100, %s101, %s102
    %p106 = pneg %p100
    %p107 = scmp.eq.s32.totalorder %s11, 1
    %p108 = por %p106, %p107
    %p109 = scmp.ne.s32.totalorder %s101, %s104
    %p110 = scmp.eq.s32.totalorder %s11, 0
    %p111 = por %p109, %p110
    %p112 = scmp.ne.s32.totalorder %s101, %s104
    %p113 = scmp.eq.s32.totalorder %s16, 1
    %p114 = por %p112, %p113
    %p115 = scmp.ne.s32.totalorder %s104, %s105
    %p116 = scmp.eq.s32.totalorder %s16, 0
    %p117 = por %p115, %p116
    %p118 = scmp.ne.s32.totalorder %s104, %s105
    %p119 = scmp.eq.s32.totalorder %s17, 1
    %p120 = por %p118, %p119
    %p122 = scmp.ne.s32.totalorder %s105, %s121
    %p123 = scmp.eq.s32.totalorder %s17, 0
    %p124 = por %p122, %p123
    %s125 = ssub.s32 %s19, %s26
    %p126 = scmp.eq.s32.totalorder %s125, 0
    %s128 = sadd.s32 %s127, 1
    %s129 = scalar_select %p126, %s127, %s128
    %p132 = pneg %p126
    %p133 = scmp.eq.s32.totalorder %s11, 1
    %p134 = por %p132, %p133
    %p135 = scmp.ne.s32.totalorder %s127, %s130
    %p136 = scmp.eq.s32.totalorder %s11, 0
    %p137 = por %p135, %p136
    %p138 = scmp.ne.s32.totalorder %s127, %s130
    %p139 = scmp.eq.s32.totalorder %s16, 1
    %p140 = por %p138, %p139
    %p141 = scmp.ne.s32.totalorder %s130, %s131
    %p142 = scmp.eq.s32.totalorder %s16, 0
    %p143 = por %p141, %p142
    %p144 = scmp.ne.s32.totalorder %s130, %s131
    %p145 = scmp.eq.s32.totalorder %s17, 1
    %p146 = por %p144, %p145
    %p148 = scmp.ne.s32.totalorder %s131, %s147
    %p149 = scmp.eq.s32.totalorder %s17, 0
    %p150 = por %p148, %p149
    %s151 = ssub.s32 %s18, %s30
    %s152 = ssub.s32 %s19, %s26
    %s153 = sor.u32 %s151, %s152
    %p154 = scmp.eq.s32.totalorder %s153, 0
    %s156 = sadd.s32 %s155, 1
    %s157 = scalar_select %p154, %s155, %s156
    %p160 = pneg %p154
    %p161 = scmp.eq.s32.totalorder %s11, 1
    %p162 = por %p160, %p161
    %p163 = scmp.ne.s32.totalorder %s155, %s158
    %p164 = scmp.eq.s32.totalorder %s11, 0
    %p165 = por %p163, %p164
    %p166 = scmp.ne.s32.totalorder %s155, %s158
    %p167 = scmp.eq.s32.totalorder %s16, 1
    %p168 = por %p166, %p167
    %p169 = scmp.ne.s32.totalorder %s158, %s159
    %p170 = scmp.eq.s32.totalorder %s16, 0
    %p171 = por %p169, %p170
    %p172 = scmp.ne.s32.totalorder %s158, %s159
    %p173 = scmp.eq.s32.totalorder %s17, 1
    %p174 = por %p172, %p173
    %p176 = scmp.ne.s32.totalorder %s159, %s175
    %p177 = scmp.eq.s32.totalorder %s17, 0
    %p178 = por %p176, %p177
    %p179 = scmp.le.s32.totalorder 1, %s11
    %p180 = scmp.lt.s32.totalorder %s11, 3
    %p181 = pnand %p179, %p180
    %p182 = pneg %p181
    // Predicated region
    $region9: #{tpu_custom_call.1} parent=5 // pred_check
      _
    $region10: #{tpu_custom_call.1} parent=5 // pred_check_branch
      %184 = sbr.rel (%p181) target = $region12
    $region11: #{tpu_custom_call.1} parent=5 // pred_region
      %s185 = ssub.s32 %s11, 1
      // Predicated region
      $region13: #{tpu_custom_call.1} parent=11 // pred_check
        %p186 = pneg %p70
      $region14: #{tpu_custom_call.1} parent=11 // pred_check_branch
        %188 = sbr.rel (%p186) target = $region16
      $region15: #{tpu_custom_call.1} parent=11 // pred_region
        _
      $region16: #{tpu_custom_call.1} parent=11 // pred_fallthru
        _
      // Predicated region
      $region17: #{tpu_custom_call.1} parent=11 // pred_check
        %p189 = pneg %p91
      $region18: #{tpu_custom_call.1} parent=11 // pred_check_branch
        %191 = sbr.rel (%p189) target = $region20
      $region19: #{tpu_custom_call.1} parent=11 // pred_region
        _
      $region20: #{tpu_custom_call.1} parent=11 // pred_fallthru
        _
      // Predicated region
      $region21: #{tpu_custom_call.1} parent=11 // pred_check
        %p192 = pneg %p117
      $region22: #{tpu_custom_call.1} parent=11 // pred_check_branch
        %194 = sbr.rel (%p192) target = $region24
      $region23: #{tpu_custom_call.1} parent=11 // pred_region
        %p195 = scmp.lt.s32.totalorder %s21, 0
        %s196 = scalar_select %p195, %s21, 0
        %s197 = smul.addr %s196, 4
        %s198 = scalar_lea.vmem %s3, %s197
      $region24: #{tpu_custom_call.1} parent=11 // pred_fallthru
        _
      // Predicated region
      $region25: #{tpu_custom_call.1} parent=11 // pred_check
        %p199 = pneg %p143
      $region26: #{tpu_custom_call.1} parent=11 // pred_check_branch
        %201 = sbr.rel (%p199) target = $region28
      $region27: #{tpu_custom_call.1} parent=11 // pred_region
        %p202 = scmp.lt.s32.totalorder %s21, 0
        %s203 = scalar_select %p202, %s21, 0
        %s204 = scalar_lea.vmem %s4, %s203
      $region28: #{tpu_custom_call.1} parent=11 // pred_fallthru
        _
    $region12: #{tpu_custom_call.1} parent=5 // pred_fallthru
      _
    %p205 = scmp.lt.s32.totalorder %s11, 2
    // Predicated region
    $region29: #{tpu_custom_call.1} parent=5 // pred_check
      %p206 = pneg %p205
    $region30: #{tpu_custom_call.1} parent=5 // pred_check_branch
      %208 = sbr.rel (%p206) target = $region32
    $region31: #{tpu_custom_call.1} parent=5 // pred_region
      // Predicated region
      $region33: #{tpu_custom_call.1} parent=31 // pred_check
        %p209 = pneg %p43
      $region34: #{tpu_custom_call.1} parent=31 // pred_check_branch
        %211 = sbr.rel (%p209) target = $region36
      $region35: #{tpu_custom_call.1} parent=31 // pred_region
        %p212 = scmp.lt.s32.totalorder %s18, 1
        %s213 = scalar_select %p212, %s18, 1
        %s214 = smul.addr %s213, 54
        %s215 = smul.addr %s214, 8
        %s216 = scalar_lea.vmem %s0, %s215
      $region36: #{tpu_custom_call.1} parent=31 // pred_fallthru
        _
    $region32: #{tpu_custom_call.1} parent=5 // pred_fallthru
      _
    %p217 = scmp.le.s32.totalorder 1, %s11
    %p218 = scmp.lt.s32.totalorder %s11, 3
    %p219 = pnand %p217, %p218
    %p220 = pneg %p219
    // Predicated region
    $region37: #{tpu_custom_call.1} parent=5 // pred_check
      _
    $region38: #{tpu_custom_call.1} parent=5 // pred_check_branch
      %222 = sbr.rel (%p219) target = $region40
    $region39: #{tpu_custom_call.1} parent=5 // pred_region
      %s223 = ssub.s32 %s11, 1
      %p224 = scmp.lt.s32.totalorder %s20, 1
      %s225 = scalar_select %p224, %s20, 1
      %s226 = smul.addr %s225, 54
      %s227 = smul.addr %s226, 8
      %s228 = scalar_lea.vmem %s0, %s227
      %p229 = pneg %p49
      %p230 = pneg %p46
      %p231 = pneg %p70
      %p232 = pneg %p67
      %p233 = pneg %p91
      %p234 = pneg %p88
      %p235 = scmp.lt.s32.totalorder %s21, 0
      %s236 = scalar_select %p235, %s21, 0
      %s237 = smul.addr %s236, 4
      %s238 = scalar_lea.vmem %s3, %s237
      %p239 = pneg %p117
      %p240 = pneg %p114
      %p241 = scmp.lt.s32.totalorder %s21, 0
      %s242 = scalar_select %p241, %s21, 0
      %s243 = scalar_lea.vmem %s4, %s242
      %p244 = pneg %p143
      %p245 = pneg %p140
      %p246 = pneg %p171
      %p247 = pneg %p168
      %p248 = scmp.lt.s32.totalorder %s20, 1
      %s249 = scalar_select %p248, %s20, 1
      %p250 = scmp.lt.s32.totalorder %s21, 0
      %s251 = scalar_select %p250, %s21, 0
      %s252 = smul.addr %s249, 32
      %s253 = sadd.s32 %s251, %s252
      %s254 = smul.addr %s253, 8
      %s255 = scalar_lea.vmem %s5, %s254
      %p256 = scmp.lt.s32.totalorder %s20, 1
      %s257 = scalar_select %p256, %s20, 1
      %s258 = smul.addr %s257, 54
      %s259 = smul.addr %s258, 8
      %s260 = scalar_lea.vmem %s0, %s259
      %p261 = scmp.lt.s32.totalorder %s21, 0
      %s262 = scalar_select %p261, %s21, 0
      %s263 = smul.addr %s262, 4
      %s264 = scalar_lea.vmem %s3, %s263
      %p265 = scmp.lt.s32.totalorder %s21, 0
      %s266 = scalar_select %p265, %s21, 0
      %s267 = scalar_lea.vmem %s4, %s266
      %p268 = scmp.lt.s32.totalorder %s20, 1
      %s269 = scalar_select %p268, %s20, 1
      %p270 = scmp.lt.s32.totalorder %s21, 0
      %s271 = scalar_select %p270, %s21, 0
      %s272 = smul.addr %s269, 32
      %s273 = sadd.s32 %s271, %s272
      %s274 = smul.addr %s273, 8
      %s275 = scalar_lea.vmem %s5, %s274
      %p276 = scmp.eq.s32.totalorder %s21, 0
      // Predicated region
      $region41: #{tpu_custom_call.1} parent=39 // pred_check
        %p277 = pneg %p276
      $region42: #{tpu_custom_call.1} parent=39 // pred_check_branch
        %279 = sbr.rel (%p277) target = $region44
      $region43: #{tpu_custom_call.1} parent=39 // pred_region
        %v280 = vld [vmem:[%s1] sm:$0xff]
        %v281 = vld [vmem:[%s1 + $0x8] sm:$0x1]
        %v282 = vld [vmem:[%s260] sm:$0xff]
        %v283 = vld [vmem:[%s260 + $0x8] sm:$0xff]
        %v284 = vld [vmem:[%s260 + $0x18] sm:$0xff]
        %v285 = vld [vmem:[%s260 + $0x20] sm:$0xff]
        %v286 = vld [vmem:[%s260 + $0x30] sm:$0xff]
        %v287 = vld [vmem:[%s260 + $0x38] sm:$0xff]
        %v288 = vld [vmem:[%s260 + $0x48] sm:$0xff]
        %v289 = vld [vmem:[%s260 + $0x50] sm:$0xff]
        %v290 = vld [vmem:[%s260 + $0x60] sm:$0xff]
        %v291 = vld [vmem:[%s260 + $0x68] sm:$0xff]
        %v292 = vld [vmem:[%s260 + $0x78] sm:$0xff]
        %v293 = vld [vmem:[%s260 + $0x80] sm:$0xff]
        %v294 = vld [vmem:[%s260 + $0x90] sm:$0xff]
        %v295 = vld [vmem:[%s260 + $0x98] sm:$0xff]
        %v296 = vld [vmem:[%s260 + $0xa8] sm:$0xff]
        %v297 = vld [vmem:[%s260 + $0xb0] sm:$0xff]
        %v298 = vld [vmem:[%s260 + $0xc0] sm:$0xff]
        %v299 = vld [vmem:[%s260 + $0xc8] sm:$0xff]
        %v300 = vld [vmem:[%s260 + $0xd8] sm:$0xff]
        %v301 = vld [vmem:[%s260 + $0xe0] sm:$0xff]
        %v302 = vld [vmem:[%s260 + $0xf0] sm:$0xff]
        %v303 = vld [vmem:[%s260 + $0xf8] sm:$0xff]
        %v304 = vld [vmem:[%s260 + $0x108] sm:$0xff]
        %v305 = vld [vmem:[%s260 + $0x110] sm:$0xff]
        %v306 = vld [vmem:[%s260 + $0x120] sm:$0xff]
        %v307 = vld [vmem:[%s260 + $0x128] sm:$0xff]
        %v308 = vld [vmem:[%s260 + $0x138] sm:$0xff]
        %v309 = vld [vmem:[%s260 + $0x140] sm:$0xff]
        %v310 = vld [vmem:[%s260 + $0x150] sm:$0xff]
        %v311 = vld [vmem:[%s260 + $0x158] sm:$0xff]
        %v312 = vld [vmem:[%s260 + $0x168] sm:$0xff]
        %v313 = vld [vmem:[%s260 + $0x170] sm:$0xff]
        %v314 = vlaneseq
        %v315 = vshrl.u32 %v314, 7
        %v316 = vsub.s32 0, %v315
        %v317 = vrot.slane %v280, %v316
        %v318 = vmul.f32 %v282, %v317
        %v319 = vmul.f32 %v283, %v317
        %v320 = vmul.f32 %v284, %v317
        %v321 = vmul.f32 %v285, %v317
        %v322 = vmul.f32 %v286, %v317
        %v323 = vmul.f32 %v287, %v317
        %v324 = vmul.f32 %v288, %v317
        %v325 = vmul.f32 %v289, %v317
        %v326 = vmul.f32 %v290, %v317
        %v327 = vmul.f32 %v291, %v317
        %v328 = vmul.f32 %v292, %v317
        %v329 = vmul.f32 %v293, %v317
        %v330 = vmul.f32 %v294, %v317
        %v331 = vmul.f32 %v295, %v317
        %v332 = vmul.f32 %v296, %v317
        %v333 = vmul.f32 %v297, %v317
        %v334 = vmul.f32 %v298, %v317
        %v335 = vmul.f32 %v299, %v317
        %v336 = vmul.f32 %v300, %v317
        %v337 = vmul.f32 %v301, %v317
        %v338 = vmul.f32 %v302, %v317
        %v339 = vmul.f32 %v303, %v317
        %v340 = vmul.f32 %v304, %v317
        %v341 = vmul.f32 %v305, %v317
        %v342 = vmul.f32 %v306, %v317
        %v343 = vmul.f32 %v307, %v317
        %v344 = vmul.f32 %v308, %v317
        %v345 = vmul.f32 %v309, %v317
        %v346 = vmul.f32 %v310, %v317
        %v347 = vmul.f32 %v311, %v317
        %v348 = vmul.f32 %v312, %v317
        %v349 = vmul.f32 %v313, %v317
        %v350 = vadd.f32 %v318, 0.0
        %v351 = vadd.f32 %v319, 0.0
        %v352 = vadd.f32 %v320, 0.0
        %v353 = vadd.f32 %v321, 0.0
        %v354 = vadd.f32 %v322, 0.0
        %v355 = vadd.f32 %v323, 0.0
        %v356 = vadd.f32 %v324, 0.0
        %v357 = vadd.f32 %v325, 0.0
        %v358 = vadd.f32 %v326, 0.0
        %v359 = vadd.f32 %v327, 0.0
        %v360 = vadd.f32 %v328, 0.0
        %v361 = vadd.f32 %v329, 0.0
        %v362 = vadd.f32 %v330, 0.0
        %v363 = vadd.f32 %v331, 0.0
        %v364 = vadd.f32 %v332, 0.0
        %v365 = vadd.f32 %v333, 0.0
        %v366 = vadd.f32 %v334, 0.0
        %v367 = vadd.f32 %v335, 0.0
        %v368 = vadd.f32 %v336, 0.0
        %v369 = vadd.f32 %v337, 0.0
        %v370 = vadd.f32 %v338, 0.0
        %v371 = vadd.f32 %v339, 0.0
        %v372 = vadd.f32 %v340, 0.0
        %v373 = vadd.f32 %v341, 0.0
        %v374 = vadd.f32 %v342, 0.0
        %v375 = vadd.f32 %v343, 0.0
        %v376 = vadd.f32 %v344, 0.0
        %v377 = vadd.f32 %v345, 0.0
        %v378 = vadd.f32 %v346, 0.0
        %v379 = vadd.f32 %v347, 0.0
        %v380 = vadd.f32 %v348, 0.0
        %v381 = vadd.f32 %v349, 0.0
        %v382 = vld [vmem:[%s260 + $0x1] sm:$0xff]
        %v383 = vld [vmem:[%s260 + $0x9] sm:$0xff]
        %v384 = vld [vmem:[%s260 + $0x19] sm:$0xff]
        %v385 = vld [vmem:[%s260 + $0x21] sm:$0xff]
        %v386 = vld [vmem:[%s260 + $0x31] sm:$0xff]
        %v387 = vld [vmem:[%s260 + $0x39] sm:$0xff]
        %v388 = vld [vmem:[%s260 + $0x49] sm:$0xff]
        %v389 = vld [vmem:[%s260 + $0x51] sm:$0xff]
        %v390 = vld [vmem:[%s260 + $0x61] sm:$0xff]
        %v391 = vld [vmem:[%s260 + $0x69] sm:$0xff]
        %v392 = vld [vmem:[%s260 + $0x79] sm:$0xff]
        %v393 = vld [vmem:[%s260 + $0x81] sm:$0xff]
        %v394 = vld [vmem:[%s260 + $0x91] sm:$0xff]
        %v395 = vld [vmem:[%s260 + $0x99] sm:$0xff]
        %v396 = vld [vmem:[%s260 + $0xa9] sm:$0xff]
        %v397 = vld [vmem:[%s260 + $0xb1] sm:$0xff]
        %v398 = vld [vmem:[%s260 + $0xc1] sm:$0xff]
        %v399 = vld [vmem:[%s260 + $0xc9] sm:$0xff]
        %v400 = vld [vmem:[%s260 + $0xd9] sm:$0xff]
        %v401 = vld [vmem:[%s260 + $0xe1] sm:$0xff]
        %v402 = vld [vmem:[%s260 + $0xf1] sm:$0xff]
        %v403 = vld [vmem:[%s260 + $0xf9] sm:$0xff]
        %v404 = vld [vmem:[%s260 + $0x109] sm:$0xff]
        %v405 = vld [vmem:[%s260 + $0x111] sm:$0xff]
        %v406 = vld [vmem:[%s260 + $0x121] sm:$0xff]
        %v407 = vld [vmem:[%s260 + $0x129] sm:$0xff]
        %v408 = vld [vmem:[%s260 + $0x139] sm:$0xff]
        %v409 = vld [vmem:[%s260 + $0x141] sm:$0xff]
        %v410 = vld [vmem:[%s260 + $0x151] sm:$0xff]
        %v411 = vld [vmem:[%s260 + $0x159] sm:$0xff]
        %v412 = vld [vmem:[%s260 + $0x169] sm:$0xff]
        %v413 = vld [vmem:[%s260 + $0x171] sm:$0xff]
        %v414 = vlaneseq
        %v415 = vshrl.u32 %v414, 7
        %v416 = vsub.s32 1, %v415
        %v417 = vrot.slane %v280, %v416
        %v418 = vmul.f32 %v382, %v417
        %v419 = vmul.f32 %v383, %v417
        %v420 = vmul.f32 %v384, %v417
        %v421 = vmul.f32 %v385, %v417
        %v422 = vmul.f32 %v386, %v417
        %v423 = vmul.f32 %v387, %v417
        %v424 = vmul.f32 %v388, %v417
        %v425 = vmul.f32 %v389, %v417
        %v426 = vmul.f32 %v390, %v417
        %v427 = vmul.f32 %v391, %v417
        %v428 = vmul.f32 %v392, %v417
        %v429 = vmul.f32 %v393, %v417
        %v430 = vmul.f32 %v394, %v417
        %v431 = vmul.f32 %v395, %v417
        %v432 = vmul.f32 %v396, %v417
        %v433 = vmul.f32 %v397, %v417
        %v434 = vmul.f32 %v398, %v417
        %v435 = vmul.f32 %v399, %v417
        %v436 = vmul.f32 %v400, %v417
        %v437 = vmul.f32 %v401, %v417
        %v438 = vmul.f32 %v402, %v417
        %v439 = vmul.f32 %v403, %v417
        %v440 = vmul.f32 %v404, %v417
        %v441 = vmul.f32 %v405, %v417
        %v442 = vmul.f32 %v406, %v417
        %v443 = vmul.f32 %v407, %v417
        %v444 = vmul.f32 %v408, %v417
        %v445 = vmul.f32 %v409, %v417
        %v446 = vmul.f32 %v410, %v417
        %v447 = vmul.f32 %v411, %v417
        %v448 = vmul.f32 %v412, %v417
        %v449 = vmul.f32 %v413, %v417
        %v450 = vadd.f32 %v350, %v418
        %v451 = vadd.f32 %v351, %v419
        %v452 = vadd.f32 %v352, %v420
        %v453 = vadd.f32 %v353, %v421
        %v454 = vadd.f32 %v354, %v422
        %v455 = vadd.f32 %v355, %v423
        %v456 = vadd.f32 %v356, %v424
        %v457 = vadd.f32 %v357, %v425
        %v458 = vadd.f32 %v358, %v426
        %v459 = vadd.f32 %v359, %v427
        %v460 = vadd.f32 %v360, %v428
        %v461 = vadd.f32 %v361, %v429
        %v462 = vadd.f32 %v362, %v430
        %v463 = vadd.f32 %v363, %v431
        %v464 = vadd.f32 %v364, %v432
        %v465 = vadd.f32 %v365, %v433
        %v466 = vadd.f32 %v366, %v434
        %v467 = vadd.f32 %v367, %v435
        %v468 = vadd.f32 %v368, %v436
        %v469 = vadd.f32 %v369, %v437
        %v470 = vadd.f32 %v370, %v438
        %v471 = vadd.f32 %v371, %v439
        %v472 = vadd.f32 %v372, %v440
        %v473 = vadd.f32 %v373, %v441
        %v474 = vadd.f32 %v374, %v442
        %v475 = vadd.f32 %v375, %v443
        %v476 = vadd.f32 %v376, %v444
        %v477 = vadd.f32 %v377, %v445
        %v478 = vadd.f32 %v378, %v446
        %v479 = vadd.f32 %v379, %v447
        %v480 = vadd.f32 %v380, %v448
        %v481 = vadd.f32 %v381, %v449
        %v482 = vld [vmem:[%s260 + $0x2] sm:$0xff]
        %v483 = vld [vmem:[%s260 + $0xa] sm:$0xff]
        %v484 = vld [vmem:[%s260 + $0x1a] sm:$0xff]
        %v485 = vld [vmem:[%s260 + $0x22] sm:$0xff]
        %v486 = vld [vmem:[%s260 + $0x32] sm:$0xff]
        %v487 = vld [vmem:[%s260 + $0x3a] sm:$0xff]
        %v488 = vld [vmem:[%s260 + $0x4a] sm:$0xff]
        %v489 = vld [vmem:[%s260 + $0x52] sm:$0xff]
        %v490 = vld [vmem:[%s260 + $0x62] sm:$0xff]
        %v491 = vld [vmem:[%s260 + $0x6a] sm:$0xff]
        %v492 = vld [vmem:[%s260 + $0x7a] sm:$0xff]
        %v493 = vld [vmem:[%s260 + $0x82] sm:$0xff]
        %v494 = vld [vmem:[%s260 + $0x92] sm:$0xff]
        %v495 = vld [vmem:[%s260 + $0x9a] sm:$0xff]
        %v496 = vld [vmem:[%s260 + $0xaa] sm:$0xff]
        %v497 = vld [vmem:[%s260 + $0xb2] sm:$0xff]
        %v498 = vld [vmem:[%s260 + $0xc2] sm:$0xff]
        %v499 = vld [vmem:[%s260 + $0xca] sm:$0xff]
        %v500 = vld [vmem:[%s260 + $0xda] sm:$0xff]
        %v501 = vld [vmem:[%s260 + $0xe2] sm:$0xff]
        %v502 = vld [vmem:[%s260 + $0xf2] sm:$0xff]
        %v503 = vld [vmem:[%s260 + $0xfa] sm:$0xff]
        %v504 = vld [vmem:[%s260 + $0x10a] sm:$0xff]
        %v505 = vld [vmem:[%s260 + $0x112] sm:$0xff]
        %v506 = vld [vmem:[%s260 + $0x122] sm:$0xff]
        %v507 = vld [vmem:[%s260 + $0x12a] sm:$0xff]
        %v508 = vld [vmem:[%s260 + $0x13a] sm:$0xff]
        %v509 = vld [vmem:[%s260 + $0x142] sm:$0xff]
        %v510 = vld [vmem:[%s260 + $0x152] sm:$0xff]
        %v511 = vld [vmem:[%s260 + $0x15a] sm:$0xff]
        %v512 = vld [vmem:[%s260 + $0x16a] sm:$0xff]
        %v513 = vld [vmem:[%s260 + $0x172] sm:$0xff]
        %v514 = vlaneseq
        %v515 = vshrl.u32 %v514, 7
        %v516 = vsub.s32 2, %v515
        %v517 = vrot.slane %v280, %v516
        %v518 = vmul.f32 %v482, %v517
        %v519 = vmul.f32 %v483, %v517
        %v520 = vmul.f32 %v484, %v517
        %v521 = vmul.f32 %v485, %v517
        %v522 = vmul.f32 %v486, %v517
        %v523 = vmul.f32 %v487, %v517
        %v524 = vmul.f32 %v488, %v517
        %v525 = vmul.f32 %v489, %v517
        %v526 = vmul.f32 %v490, %v517
        %v527 = vmul.f32 %v491, %v517
        %v528 = vmul.f32 %v492, %v517
        %v529 = vmul.f32 %v493, %v517
        %v530 = vmul.f32 %v494, %v517
        %v531 = vmul.f32 %v495, %v517
        %v532 = vmul.f32 %v496, %v517
        %v533 = vmul.f32 %v497, %v517
        %v534 = vmul.f32 %v498, %v517
        %v535 = vmul.f32 %v499, %v517
        %v536 = vmul.f32 %v500, %v517
        %v537 = vmul.f32 %v501, %v517
        %v538 = vmul.f32 %v502, %v517
        %v539 = vmul.f32 %v503, %v517
        %v540 = vmul.f32 %v504, %v517
        %v541 = vmul.f32 %v505, %v517
        %v542 = vmul.f32 %v506, %v517
        %v543 = vmul.f32 %v507, %v517
        %v544 = vmul.f32 %v508, %v517
        %v545 = vmul.f32 %v509, %v517
        %v546 = vmul.f32 %v510, %v517
        %v547 = vmul.f32 %v511, %v517
        %v548 = vmul.f32 %v512, %v517
        %v549 = vmul.f32 %v513, %v517
        %v550 = vadd.f32 %v450, %v518
        %v551 = vadd.f32 %v451, %v519
        %v552 = vadd.f32 %v452, %v520
        %v553 = vadd.f32 %v453, %v521
        %v554 = vadd.f32 %v454, %v522
        %v555 = vadd.f32 %v455, %v523
        %v556 = vadd.f32 %v456, %v524
        %v557 = vadd.f32 %v457, %v525
        %v558 = vadd.f32 %v458, %v526
        %v559 = vadd.f32 %v459, %v527
        %v560 = vadd.f32 %v460, %v528
        %v561 = vadd.f32 %v461, %v529
        %v562 = vadd.f32 %v462, %v530
        %v563 = vadd.f32 %v463, %v531
        %v564 = vadd.f32 %v464, %v532
        %v565 = vadd.f32 %v465, %v533
        %v566 = vadd.f32 %v466, %v534
        %v567 = vadd.f32 %v467, %v535
        %v568 = vadd.f32 %v468, %v536
        %v569 = vadd.f32 %v469, %v537
        %v570 = vadd.f32 %v470, %v538
        %v571 = vadd.f32 %v471, %v539
        %v572 = vadd.f32 %v472, %v540
        %v573 = vadd.f32 %v473, %v541
        %v574 = vadd.f32 %v474, %v542
        %v575 = vadd.f32 %v475, %v543
        %v576 = vadd.f32 %v476, %v544
        %v577 = vadd.f32 %v477, %v545
        %v578 = vadd.f32 %v478, %v546
        %v579 = vadd.f32 %v479, %v547
        %v580 = vadd.f32 %v480, %v548
        %v581 = vadd.f32 %v481, %v549
        %s582 = scalar_lea.vmem %s260, 24
        %v583 = vld [vmem:[%s582] sm:$0xff]
        %v584 = vld [vmem:[%s582 + $0x8] sm:$0xff]
        %v585 = vld [vmem:[%s582 + $0x18] sm:$0xff]
        %v586 = vld [vmem:[%s582 + $0x20] sm:$0xff]
        %v587 = vld [vmem:[%s582 + $0x30] sm:$0xff]
        %v588 = vld [vmem:[%s582 + $0x38] sm:$0xff]
        %v589 = vld [vmem:[%s582 + $0x48] sm:$0xff]
        %v590 = vld [vmem:[%s582 + $0x50] sm:$0xff]
        %v591 = vld [vmem:[%s582 + $0x60] sm:$0xff]
        %v592 = vld [vmem:[%s582 + $0x68] sm:$0xff]
        %v593 = vld [vmem:[%s582 + $0x78] sm:$0xff]
        %v594 = vld [vmem:[%s582 + $0x80] sm:$0xff]
        %v595 = vld [vmem:[%s582 + $0x90] sm:$0xff]
        %v596 = vld [vmem:[%s582 + $0x98] sm:$0xff]
        %v597 = vld [vmem:[%s582 + $0xa8] sm:$0xff]
        %v598 = vld [vmem:[%s582 + $0xb0] sm:$0xff]
        %v599 = vld [vmem:[%s582 + $0xc0] sm:$0xff]
        %v600 = vld [vmem:[%s582 + $0xc8] sm:$0xff]
        %v601 = vld [vmem:[%s582 + $0xd8] sm:$0xff]
        %v602 = vld [vmem:[%s582 + $0xe0] sm:$0xff]
        %v603 = vld [vmem:[%s582 + $0xf0] sm:$0xff]
        %v604 = vld [vmem:[%s582 + $0xf8] sm:$0xff]
        %v605 = vld [vmem:[%s582 + $0x108] sm:$0xff]
        %v606 = vld [vmem:[%s582 + $0x110] sm:$0xff]
        %v607 = vld [vmem:[%s582 + $0x120] sm:$0xff]
        %v608 = vld [vmem:[%s582 + $0x128] sm:$0xff]
        %v609 = vld [vmem:[%s582 + $0x138] sm:$0xff]
        %v610 = vld [vmem:[%s582 + $0x140] sm:$0xff]
        %v611 = vld [vmem:[%s582 + $0x150] sm:$0xff]
        %v612 = vld [vmem:[%s582 + $0x158] sm:$0xff]
        %v613 = vld [vmem:[%s582 + $0x168] sm:$0xff]
        %v614 = vld [vmem:[%s582 + $0x170] sm:$0xff]
        %v615 = vlaneseq
        %v616 = vshrl.u32 %v615, 7
        %v617 = vsub.s32 3, %v616
        %v618 = vrot.slane %v280, %v617
        %v619 = vmul.f32 %v583, %v618
        %v620 = vmul.f32 %v584, %v618
        %v621 = vmul.f32 %v585, %v618
        %v622 = vmul.f32 %v586, %v618
        %v623 = vmul.f32 %v587, %v618
        %v624 = vmul.f32 %v588, %v618
        %v625 = vmul.f32 %v589, %v618
        %v626 = vmul.f32 %v590, %v618
        %v627 = vmul.f32 %v591, %v618
        %v628 = vmul.f32 %v592, %v618
        %v629 = vmul.f32 %v593, %v618
        %v630 = vmul.f32 %v594, %v618
        %v631 = vmul.f32 %v595, %v618
        %v632 = vmul.f32 %v596, %v618
        %v633 = vmul.f32 %v597, %v618
        %v634 = vmul.f32 %v598, %v618
        %v635 = vmul.f32 %v599, %v618
        %v636 = vmul.f32 %v600, %v618
        %v637 = vmul.f32 %v601, %v618
        %v638 = vmul.f32 %v602, %v618
        %v639 = vmul.f32 %v603, %v618
        %v640 = vmul.f32 %v604, %v618
        %v641 = vmul.f32 %v605, %v618
        %v642 = vmul.f32 %v606, %v618
        %v643 = vmul.f32 %v607, %v618
        %v644 = vmul.f32 %v608, %v618
        %v645 = vmul.f32 %v609, %v618
        %v646 = vmul.f32 %v610, %v618
        %v647 = vmul.f32 %v611, %v618
        %v648 = vmul.f32 %v612, %v618
        %v649 = vmul.f32 %v613, %v618
        %v650 = vmul.f32 %v614, %v618
        %v651 = vadd.f32 %v550, %v619
        %v652 = vadd.f32 %v551, %v620
        %v653 = vadd.f32 %v552, %v621
        %v654 = vadd.f32 %v553, %v622
        %v655 = vadd.f32 %v554, %v623
        %v656 = vadd.f32 %v555, %v624
        %v657 = vadd.f32 %v556, %v625
        %v658 = vadd.f32 %v557, %v626
        %v659 = vadd.f32 %v558, %v627
        %v660 = vadd.f32 %v559, %v628
        %v661 = vadd.f32 %v560, %v629
        %v662 = vadd.f32 %v561, %v630
        %v663 = vadd.f32 %v562, %v631
        %v664 = vadd.f32 %v563, %v632
        %v665 = vadd.f32 %v564, %v633
        %v666 = vadd.f32 %v565, %v634
        %v667 = vadd.f32 %v566, %v635
        %v668 = vadd.f32 %v567, %v636
        %v669 = vadd.f32 %v568, %v637
        %v670 = vadd.f32 %v569, %v638
        %v671 = vadd.f32 %v570, %v639
        %v672 = vadd.f32 %v571, %v640
        %v673 = vadd.f32 %v572, %v641
        %v674 = vadd.f32 %v573, %v642
        %v675 = vadd.f32 %v574, %v643
        %v676 = vadd.f32 %v575, %v644
        %v677 = vadd.f32 %v576, %v645
        %v678 = vadd.f32 %v577, %v646
        %v679 = vadd.f32 %v578, %v647
        %v680 = vadd.f32 %v579, %v648
        %v681 = vadd.f32 %v580, %v649
        %v682 = vadd.f32 %v581, %v650
        %v683 = vld [vmem:[%s582 + $0x1] sm:$0xff]
        %v684 = vld [vmem:[%s582 + $0x9] sm:$0xff]
        %v685 = vld [vmem:[%s582 + $0x19] sm:$0xff]
        %v686 = vld [vmem:[%s582 + $0x21] sm:$0xff]
        %v687 = vld [vmem:[%s582 + $0x31] sm:$0xff]
        %v688 = vld [vmem:[%s582 + $0x39] sm:$0xff]
        %v689 = vld [vmem:[%s582 + $0x49] sm:$0xff]
        %v690 = vld [vmem:[%s582 + $0x51] sm:$0xff]
        %v691 = vld [vmem:[%s582 + $0x61] sm:$0xff]
        %v692 = vld [vmem:[%s582 + $0x69] sm:$0xff]
        %v693 = vld [vmem:[%s582 + $0x79] sm:$0xff]
        %v694 = vld [vmem:[%s582 + $0x81] sm:$0xff]
        %v695 = vld [vmem:[%s582 + $0x91] sm:$0xff]
        %v696 = vld [vmem:[%s582 + $0x99] sm:$0xff]
        %v697 = vld [vmem:[%s582 + $0xa9] sm:$0xff]
        %v698 = vld [vmem:[%s582 + $0xb1] sm:$0xff]
        %v699 = vld [vmem:[%s582 + $0xc1] sm:$0xff]
        %v700 = vld [vmem:[%s582 + $0xc9] sm:$0xff]
        %v701 = vld [vmem:[%s582 + $0xd9] sm:$0xff]
        %v702 = vld [vmem:[%s582 + $0xe1] sm:$0xff]
        %v703 = vld [vmem:[%s582 + $0xf1] sm:$0xff]
        %v704 = vld [vmem:[%s582 + $0xf9] sm:$0xff]
        %v705 = vld [vmem:[%s582 + $0x109] sm:$0xff]
        %v706 = vld [vmem:[%s582 + $0x111] sm:$0xff]
        %v707 = vld [vmem:[%s582 + $0x121] sm:$0xff]
        %v708 = vld [vmem:[%s582 + $0x129] sm:$0xff]
        %v709 = vld [vmem:[%s582 + $0x139] sm:$0xff]
        %v710 = vld [vmem:[%s582 + $0x141] sm:$0xff]
        %v711 = vld [vmem:[%s582 + $0x151] sm:$0xff]
        %v712 = vld [vmem:[%s582 + $0x159] sm:$0xff]
        %v713 = vld [vmem:[%s582 + $0x169] sm:$0xff]
        %v714 = vld [vmem:[%s582 + $0x171] sm:$0xff]
        %v715 = vlaneseq
        %v716 = vshrl.u32 %v715, 7
        %v717 = vsub.s32 4, %v716
        %v718 = vrot.slane %v280, %v717
        %v719 = vmul.f32 %v683, %v718
        %v720 = vmul.f32 %v684, %v718
        %v721 = vmul.f32 %v685, %v718
        %v722 = vmul.f32 %v686, %v718
        %v723 = vmul.f32 %v687, %v718
        %v724 = vmul.f32 %v688, %v718
        %v725 = vmul.f32 %v689, %v718
        %v726 = vmul.f32 %v690, %v718
        %v727 = vmul.f32 %v691, %v718
        %v728 = vmul.f32 %v692, %v718
        %v729 = vmul.f32 %v693, %v718
        %v730 = vmul.f32 %v694, %v718
        %v731 = vmul.f32 %v695, %v718
        %v732 = vmul.f32 %v696, %v718
        %v733 = vmul.f32 %v697, %v718
        %v734 = vmul.f32 %v698, %v718
        %v735 = vmul.f32 %v699, %v718
        %v736 = vmul.f32 %v700, %v718
        %v737 = vmul.f32 %v701, %v718
        %v738 = vmul.f32 %v702, %v718
        %v739 = vmul.f32 %v703, %v718
        %v740 = vmul.f32 %v704, %v718
        %v741 = vmul.f32 %v705, %v718
        %v742 = vmul.f32 %v706, %v718
        %v743 = vmul.f32 %v707, %v718
        %v744 = vmul.f32 %v708, %v718
        %v745 = vmul.f32 %v709, %v718
        %v746 = vmul.f32 %v710, %v718
        %v747 = vmul.f32 %v711, %v718
        %v748 = vmul.f32 %v712, %v718
        %v749 = vmul.f32 %v713, %v718
        %v750 = vmul.f32 %v714, %v718
        %v751 = vadd.f32 %v651, %v719
        %v752 = vadd.f32 %v652, %v720
        %v753 = vadd.f32 %v653, %v721
        %v754 = vadd.f32 %v654, %v722
        %v755 = vadd.f32 %v655, %v723
        %v756 = vadd.f32 %v656, %v724
        %v757 = vadd.f32 %v657, %v725
        %v758 = vadd.f32 %v658, %v726
        %v759 = vadd.f32 %v659, %v727
        %v760 = vadd.f32 %v660, %v728
        %v761 = vadd.f32 %v661, %v729
        %v762 = vadd.f32 %v662, %v730
        %v763 = vadd.f32 %v663, %v731
        %v764 = vadd.f32 %v664, %v732
        %v765 = vadd.f32 %v665, %v733
        %v766 = vadd.f32 %v666, %v734
        %v767 = vadd.f32 %v667, %v735
        %v768 = vadd.f32 %v668, %v736
        %v769 = vadd.f32 %v669, %v737
        %v770 = vadd.f32 %v670, %v738
        %v771 = vadd.f32 %v671, %v739
        %v772 = vadd.f32 %v672, %v740
        %v773 = vadd.f32 %v673, %v741
        %v774 = vadd.f32 %v674, %v742
        %v775 = vadd.f32 %v675, %v743
        %v776 = vadd.f32 %v676, %v744
        %v777 = vadd.f32 %v677, %v745
        %v778 = vadd.f32 %v678, %v746
        %v779 = vadd.f32 %v679, %v747
        %v780 = vadd.f32 %v680, %v748
        %v781 = vadd.f32 %v681, %v749
        %v782 = vadd.f32 %v682, %v750
        %v783 = vld [vmem:[%s582 + $0x2] sm:$0xff]
        %v784 = vld [vmem:[%s582 + $0xa] sm:$0xff]
        %v785 = vld [vmem:[%s582 + $0x1a] sm:$0xff]
        %v786 = vld [vmem:[%s582 + $0x22] sm:$0xff]
        %v787 = vld [vmem:[%s582 + $0x32] sm:$0xff]
        %v788 = vld [vmem:[%s582 + $0x3a] sm:$0xff]
        %v789 = vld [vmem:[%s582 + $0x4a] sm:$0xff]
        %v790 = vld [vmem:[%s582 + $0x52] sm:$0xff]
        %v791 = vld [vmem:[%s582 + $0x62] sm:$0xff]
        %v792 = vld [vmem:[%s582 + $0x6a] sm:$0xff]
        %v793 = vld [vmem:[%s582 + $0x7a] sm:$0xff]
        %v794 = vld [vmem:[%s582 + $0x82] sm:$0xff]
        %v795 = vld [vmem:[%s582 + $0x92] sm:$0xff]
        %v796 = vld [vmem:[%s582 + $0x9a] sm:$0xff]
        %v797 = vld [vmem:[%s582 + $0xaa] sm:$0xff]
        %v798 = vld [vmem:[%s582 + $0xb2] sm:$0xff]
        %v799 = vld [vmem:[%s582 + $0xc2] sm:$0xff]
        %v800 = vld [vmem:[%s582 + $0xca] sm:$0xff]
        %v801 = vld [vmem:[%s582 + $0xda] sm:$0xff]
        %v802 = vld [vmem:[%s582 + $0xe2] sm:$0xff]
        %v803 = vld [vmem:[%s582 + $0xf2] sm:$0xff]
        %v804 = vld [vmem:[%s582 + $0xfa] sm:$0xff]
        %v805 = vld [vmem:[%s582 + $0x10a] sm:$0xff]
        %v806 = vld [vmem:[%s582 + $0x112] sm:$0xff]
        %v807 = vld [vmem:[%s582 + $0x122] sm:$0xff]
        %v808 = vld [vmem:[%s582 + $0x12a] sm:$0xff]
        %v809 = vld [vmem:[%s582 + $0x13a] sm:$0xff]
        %v810 = vld [vmem:[%s582 + $0x142] sm:$0xff]
        %v811 = vld [vmem:[%s582 + $0x152] sm:$0xff]
        %v812 = vld [vmem:[%s582 + $0x15a] sm:$0xff]
        %v813 = vld [vmem:[%s582 + $0x16a] sm:$0xff]
        %v814 = vld [vmem:[%s582 + $0x172] sm:$0xff]
        %v815 = vlaneseq
        %v816 = vshrl.u32 %v815, 7
        %v817 = vsub.s32 5, %v816
        %v818 = vrot.slane %v280, %v817
        %v819 = vmul.f32 %v783, %v818
        %v820 = vmul.f32 %v784, %v818
        %v821 = vmul.f32 %v785, %v818
        %v822 = vmul.f32 %v786, %v818
        %v823 = vmul.f32 %v787, %v818
        %v824 = vmul.f32 %v788, %v818
        %v825 = vmul.f32 %v789, %v818
        %v826 = vmul.f32 %v790, %v818
        %v827 = vmul.f32 %v791, %v818
        %v828 = vmul.f32 %v792, %v818
        %v829 = vmul.f32 %v793, %v818
        %v830 = vmul.f32 %v794, %v818
        %v831 = vmul.f32 %v795, %v818
        %v832 = vmul.f32 %v796, %v818
        %v833 = vmul.f32 %v797, %v818
        %v834 = vmul.f32 %v798, %v818
        %v835 = vmul.f32 %v799, %v818
        %v836 = vmul.f32 %v800, %v818
        %v837 = vmul.f32 %v801, %v818
        %v838 = vmul.f32 %v802, %v818
        %v839 = vmul.f32 %v803, %v818
        %v840 = vmul.f32 %v804, %v818
        %v841 = vmul.f32 %v805, %v818
        %v842 = vmul.f32 %v806, %v818
        %v843 = vmul.f32 %v807, %v818
        %v844 = vmul.f32 %v808, %v818
        %v845 = vmul.f32 %v809, %v818
        %v846 = vmul.f32 %v810, %v818
        %v847 = vmul.f32 %v811, %v818
        %v848 = vmul.f32 %v812, %v818
        %v849 = vmul.f32 %v813, %v818
        %v850 = vmul.f32 %v814, %v818
        %v851 = vadd.f32 %v751, %v819
        %v852 = vadd.f32 %v752, %v820
        %v853 = vadd.f32 %v753, %v821
        %v854 = vadd.f32 %v754, %v822
        %v855 = vadd.f32 %v755, %v823
        %v856 = vadd.f32 %v756, %v824
        %v857 = vadd.f32 %v757, %v825
        %v858 = vadd.f32 %v758, %v826
        %v859 = vadd.f32 %v759, %v827
        %v860 = vadd.f32 %v760, %v828
        %v861 = vadd.f32 %v761, %v829
        %v862 = vadd.f32 %v762, %v830
        %v863 = vadd.f32 %v763, %v831
        %v864 = vadd.f32 %v764, %v832
        %v865 = vadd.f32 %v765, %v833
        %v866 = vadd.f32 %v766, %v834
        %v867 = vadd.f32 %v767, %v835
        %v868 = vadd.f32 %v768, %v836
        %v869 = vadd.f32 %v769, %v837
        %v870 = vadd.f32 %v770, %v838
        %v871 = vadd.f32 %v771, %v839
        %v872 = vadd.f32 %v772, %v840
        %v873 = vadd.f32 %v773, %v841
        %v874 = vadd.f32 %v774, %v842
        %v875 = vadd.f32 %v775, %v843
        %v876 = vadd.f32 %v776, %v844
        %v877 = vadd.f32 %v777, %v845
        %v878 = vadd.f32 %v778, %v846
        %v879 = vadd.f32 %v779, %v847
        %v880 = vadd.f32 %v780, %v848
        %v881 = vadd.f32 %v781, %v849
        %v882 = vadd.f32 %v782, %v850
        %s883 = scalar_lea.vmem %s260, 48
        %v884 = vld [vmem:[%s883] sm:$0xff]
        %v885 = vld [vmem:[%s883 + $0x8] sm:$0xff]
        %v886 = vld [vmem:[%s883 + $0x18] sm:$0xff]
        %v887 = vld [vmem:[%s883 + $0x20] sm:$0xff]
        %v888 = vld [vmem:[%s883 + $0x30] sm:$0xff]
        %v889 = vld [vmem:[%s883 + $0x38] sm:$0xff]
        %v890 = vld [vmem:[%s883 + $0x48] sm:$0xff]
        %v891 = vld [vmem:[%s883 + $0x50] sm:$0xff]
        %v892 = vld [vmem:[%s883 + $0x60] sm:$0xff]
        %v893 = vld [vmem:[%s883 + $0x68] sm:$0xff]
        %v894 = vld [vmem:[%s883 + $0x78] sm:$0xff]
        %v895 = vld [vmem:[%s883 + $0x80] sm:$0xff]
        %v896 = vld [vmem:[%s883 + $0x90] sm:$0xff]
        %v897 = vld [vmem:[%s883 + $0x98] sm:$0xff]
        %v898 = vld [vmem:[%s883 + $0xa8] sm:$0xff]
        %v899 = vld [vmem:[%s883 + $0xb0] sm:$0xff]
        %v900 = vld [vmem:[%s883 + $0xc0] sm:$0xff]
        %v901 = vld [vmem:[%s883 + $0xc8] sm:$0xff]
        %v902 = vld [vmem:[%s883 + $0xd8] sm:$0xff]
        %v903 = vld [vmem:[%s883 + $0xe0] sm:$0xff]
        %v904 = vld [vmem:[%s883 + $0xf0] sm:$0xff]
        %v905 = vld [vmem:[%s883 + $0xf8] sm:$0xff]
        %v906 = vld [vmem:[%s883 + $0x108] sm:$0xff]
        %v907 = vld [vmem:[%s883 + $0x110] sm:$0xff]
        %v908 = vld [vmem:[%s883 + $0x120] sm:$0xff]
        %v909 = vld [vmem:[%s883 + $0x128] sm:$0xff]
        %v910 = vld [vmem:[%s883 + $0x138] sm:$0xff]
        %v911 = vld [vmem:[%s883 + $0x140] sm:$0xff]
        %v912 = vld [vmem:[%s883 + $0x150] sm:$0xff]
        %v913 = vld [vmem:[%s883 + $0x158] sm:$0xff]
        %v914 = vld [vmem:[%s883 + $0x168] sm:$0xff]
        %v915 = vld [vmem:[%s883 + $0x170] sm:$0xff]
        %v916 = vlaneseq
        %v917 = vshrl.u32 %v916, 7
        %v918 = vsub.s32 6, %v917
        %v919 = vrot.slane %v280, %v918
        %v920 = vmul.f32 %v884, %v919
        %v921 = vmul.f32 %v885, %v919
        %v922 = vmul.f32 %v886, %v919
        %v923 = vmul.f32 %v887, %v919
        %v924 = vmul.f32 %v888, %v919
        %v925 = vmul.f32 %v889, %v919
        %v926 = vmul.f32 %v890, %v919
        %v927 = vmul.f32 %v891, %v919
        %v928 = vmul.f32 %v892, %v919
        %v929 = vmul.f32 %v893, %v919
        %v930 = vmul.f32 %v894, %v919
        %v931 = vmul.f32 %v895, %v919
        %v932 = vmul.f32 %v896, %v919
        %v933 = vmul.f32 %v897, %v919
        %v934 = vmul.f32 %v898, %v919
        %v935 = vmul.f32 %v899, %v919
        %v936 = vmul.f32 %v900, %v919
        %v937 = vmul.f32 %v901, %v919
        %v938 = vmul.f32 %v902, %v919
        %v939 = vmul.f32 %v903, %v919
        %v940 = vmul.f32 %v904, %v919
        %v941 = vmul.f32 %v905, %v919
        %v942 = vmul.f32 %v906, %v919
        %v943 = vmul.f32 %v907, %v919
        %v944 = vmul.f32 %v908, %v919
        %v945 = vmul.f32 %v909, %v919
        %v946 = vmul.f32 %v910, %v919
        %v947 = vmul.f32 %v911, %v919
        %v948 = vmul.f32 %v912, %v919
        %v949 = vmul.f32 %v913, %v919
        %v950 = vmul.f32 %v914, %v919
        %v951 = vmul.f32 %v915, %v919
        %v952 = vadd.f32 %v851, %v920
        %v953 = vadd.f32 %v852, %v921
        %v954 = vadd.f32 %v853, %v922
        %v955 = vadd.f32 %v854, %v923
        %v956 = vadd.f32 %v855, %v924
        %v957 = vadd.f32 %v856, %v925
        %v958 = vadd.f32 %v857, %v926
        %v959 = vadd.f32 %v858, %v927
        %v960 = vadd.f32 %v859, %v928
        %v961 = vadd.f32 %v860, %v929
        %v962 = vadd.f32 %v861, %v930
        %v963 = vadd.f32 %v862, %v931
        %v964 = vadd.f32 %v863, %v932
        %v965 = vadd.f32 %v864, %v933
        %v966 = vadd.f32 %v865, %v934
        %v967 = vadd.f32 %v866, %v935
        %v968 = vadd.f32 %v867, %v936
        %v969 = vadd.f32 %v868, %v937
        %v970 = vadd.f32 %v869, %v938
        %v971 = vadd.f32 %v870, %v939
        %v972 = vadd.f32 %v871, %v940
        %v973 = vadd.f32 %v872, %v941
        %v974 = vadd.f32 %v873, %v942
        %v975 = vadd.f32 %v874, %v943
        %v976 = vadd.f32 %v875, %v944
        %v977 = vadd.f32 %v876, %v945
        %v978 = vadd.f32 %v877, %v946
        %v979 = vadd.f32 %v878, %v947
        %v980 = vadd.f32 %v879, %v948
        %v981 = vadd.f32 %v880, %v949
        %v982 = vadd.f32 %v881, %v950
        %v983 = vadd.f32 %v882, %v951
        %v984 = vld [vmem:[%s883 + $0x1] sm:$0xff]
        %v985 = vld [vmem:[%s883 + $0x9] sm:$0xff]
        %v986 = vld [vmem:[%s883 + $0x19] sm:$0xff]
        %v987 = vld [vmem:[%s883 + $0x21] sm:$0xff]
        %v988 = vld [vmem:[%s883 + $0x31] sm:$0xff]
        %v989 = vld [vmem:[%s883 + $0x39] sm:$0xff]
        %v990 = vld [vmem:[%s883 + $0x49] sm:$0xff]
        %v991 = vld [vmem:[%s883 + $0x51] sm:$0xff]
        %v992 = vld [vmem:[%s883 + $0x61] sm:$0xff]
        %v993 = vld [vmem:[%s883 + $0x69] sm:$0xff]
        %v994 = vld [vmem:[%s883 + $0x79] sm:$0xff]
        %v995 = vld [vmem:[%s883 + $0x81] sm:$0xff]
        %v996 = vld [vmem:[%s883 + $0x91] sm:$0xff]
        %v997 = vld [vmem:[%s883 + $0x99] sm:$0xff]
        %v998 = vld [vmem:[%s883 + $0xa9] sm:$0xff]
        %v999 = vld [vmem:[%s883 + $0xb1] sm:$0xff]
        %v1000 = vld [vmem:[%s883 + $0xc1] sm:$0xff]
        %v1001 = vld [vmem:[%s883 + $0xc9] sm:$0xff]
        %v1002 = vld [vmem:[%s883 + $0xd9] sm:$0xff]
        %v1003 = vld [vmem:[%s883 + $0xe1] sm:$0xff]
        %v1004 = vld [vmem:[%s883 + $0xf1] sm:$0xff]
        %v1005 = vld [vmem:[%s883 + $0xf9] sm:$0xff]
        %v1006 = vld [vmem:[%s883 + $0x109] sm:$0xff]
        %v1007 = vld [vmem:[%s883 + $0x111] sm:$0xff]
        %v1008 = vld [vmem:[%s883 + $0x121] sm:$0xff]
        %v1009 = vld [vmem:[%s883 + $0x129] sm:$0xff]
        %v1010 = vld [vmem:[%s883 + $0x139] sm:$0xff]
        %v1011 = vld [vmem:[%s883 + $0x141] sm:$0xff]
        %v1012 = vld [vmem:[%s883 + $0x151] sm:$0xff]
        %v1013 = vld [vmem:[%s883 + $0x159] sm:$0xff]
        %v1014 = vld [vmem:[%s883 + $0x169] sm:$0xff]
        %v1015 = vld [vmem:[%s883 + $0x171] sm:$0xff]
        %v1016 = vlaneseq
        %v1017 = vshrl.u32 %v1016, 7
        %v1018 = vsub.s32 7, %v1017
        %v1019 = vrot.slane %v280, %v1018
        %v1020 = vmul.f32 %v984, %v1019
        %v1021 = vmul.f32 %v985, %v1019
        %v1022 = vmul.f32 %v986, %v1019
        %v1023 = vmul.f32 %v987, %v1019
        %v1024 = vmul.f32 %v988, %v1019
        %v1025 = vmul.f32 %v989, %v1019
        %v1026 = vmul.f32 %v990, %v1019
        %v1027 = vmul.f32 %v991, %v1019
        %v1028 = vmul.f32 %v992, %v1019
        %v1029 = vmul.f32 %v993, %v1019
        %v1030 = vmul.f32 %v994, %v1019
        %v1031 = vmul.f32 %v995, %v1019
        %v1032 = vmul.f32 %v996, %v1019
        %v1033 = vmul.f32 %v997, %v1019
        %v1034 = vmul.f32 %v998, %v1019
        %v1035 = vmul.f32 %v999, %v1019
        %v1036 = vmul.f32 %v1000, %v1019
        %v1037 = vmul.f32 %v1001, %v1019
        %v1038 = vmul.f32 %v1002, %v1019
        %v1039 = vmul.f32 %v1003, %v1019
        %v1040 = vmul.f32 %v1004, %v1019
        %v1041 = vmul.f32 %v1005, %v1019
        %v1042 = vmul.f32 %v1006, %v1019
        %v1043 = vmul.f32 %v1007, %v1019
        %v1044 = vmul.f32 %v1008, %v1019
        %v1045 = vmul.f32 %v1009, %v1019
        %v1046 = vmul.f32 %v1010, %v1019
        %v1047 = vmul.f32 %v1011, %v1019
        %v1048 = vmul.f32 %v1012, %v1019
        %v1049 = vmul.f32 %v1013, %v1019
        %v1050 = vmul.f32 %v1014, %v1019
        %v1051 = vmul.f32 %v1015, %v1019
        %v1052 = vadd.f32 %v952, %v1020
        %v1053 = vadd.f32 %v953, %v1021
        %v1054 = vadd.f32 %v954, %v1022
        %v1055 = vadd.f32 %v955, %v1023
        %v1056 = vadd.f32 %v956, %v1024
        %v1057 = vadd.f32 %v957, %v1025
        %v1058 = vadd.f32 %v958, %v1026
        %v1059 = vadd.f32 %v959, %v1027
        %v1060 = vadd.f32 %v960, %v1028
        %v1061 = vadd.f32 %v961, %v1029
        %v1062 = vadd.f32 %v962, %v1030
        %v1063 = vadd.f32 %v963, %v1031
        %v1064 = vadd.f32 %v964, %v1032
        %v1065 = vadd.f32 %v965, %v1033
        %v1066 = vadd.f32 %v966, %v1034
        %v1067 = vadd.f32 %v967, %v1035
        %v1068 = vadd.f32 %v968, %v1036
        %v1069 = vadd.f32 %v969, %v1037
        %v1070 = vadd.f32 %v970, %v1038
        %v1071 = vadd.f32 %v971, %v1039
        %v1072 = vadd.f32 %v972, %v1040
        %v1073 = vadd.f32 %v973, %v1041
        %v1074 = vadd.f32 %v974, %v1042
        %v1075 = vadd.f32 %v975, %v1043
        %v1076 = vadd.f32 %v976, %v1044
        %v1077 = vadd.f32 %v977, %v1045
        %v1078 = vadd.f32 %v978, %v1046
        %v1079 = vadd.f32 %v979, %v1047
        %v1080 = vadd.f32 %v980, %v1048
        %v1081 = vadd.f32 %v981, %v1049
        %v1082 = vadd.f32 %v982, %v1050
        %v1083 = vadd.f32 %v983, %v1051
        %v1084 = vld [vmem:[%s883 + $0x2] sm:$0xff]
        %v1085 = vld [vmem:[%s883 + $0xa] sm:$0xff]
        %v1086 = vld [vmem:[%s883 + $0x1a] sm:$0xff]
        %v1087 = vld [vmem:[%s883 + $0x22] sm:$0xff]
        %v1088 = vld [vmem:[%s883 + $0x32] sm:$0xff]
        %v1089 = vld [vmem:[%s883 + $0x3a] sm:$0xff]
        %v1090 = vld [vmem:[%s883 + $0x4a] sm:$0xff]
        %v1091 = vld [vmem:[%s883 + $0x52] sm:$0xff]
        %v1092 = vld [vmem:[%s883 + $0x62] sm:$0xff]
        %v1093 = vld [vmem:[%s883 + $0x6a] sm:$0xff]
        %v1094 = vld [vmem:[%s883 + $0x7a] sm:$0xff]
        %v1095 = vld [vmem:[%s883 + $0x82] sm:$0xff]
        %v1096 = vld [vmem:[%s883 + $0x92] sm:$0xff]
        %v1097 = vld [vmem:[%s883 + $0x9a] sm:$0xff]
        %v1098 = vld [vmem:[%s883 + $0xaa] sm:$0xff]
        %v1099 = vld [vmem:[%s883 + $0xb2] sm:$0xff]
        %v1100 = vld [vmem:[%s883 + $0xc2] sm:$0xff]
        %v1101 = vld [vmem:[%s883 + $0xca] sm:$0xff]
        %v1102 = vld [vmem:[%s883 + $0xda] sm:$0xff]
        %v1103 = vld [vmem:[%s883 + $0xe2] sm:$0xff]
        %v1104 = vld [vmem:[%s883 + $0xf2] sm:$0xff]
        %v1105 = vld [vmem:[%s883 + $0xfa] sm:$0xff]
        %v1106 = vld [vmem:[%s883 + $0x10a] sm:$0xff]
        %v1107 = vld [vmem:[%s883 + $0x112] sm:$0xff]
        %v1108 = vld [vmem:[%s883 + $0x122] sm:$0xff]
        %v1109 = vld [vmem:[%s883 + $0x12a] sm:$0xff]
        %v1110 = vld [vmem:[%s883 + $0x13a] sm:$0xff]
        %v1111 = vld [vmem:[%s883 + $0x142] sm:$0xff]
        %v1112 = vld [vmem:[%s883 + $0x152] sm:$0xff]
        %v1113 = vld [vmem:[%s883 + $0x15a] sm:$0xff]
        %v1114 = vld [vmem:[%s883 + $0x16a] sm:$0xff]
        %v1115 = vld [vmem:[%s883 + $0x172] sm:$0xff]
        %v1116 = vlaneseq
        %v1117 = vshrl.u32 %v1116, 7
        %v1118 = vsub.s32 0, %v1117
        %v1119 = vrot.slane %v281, %v1118
        %v1120 = vmul.f32 %v1084, %v1119
        %v1121 = vmul.f32 %v1085, %v1119
        %v1122 = vmul.f32 %v1086, %v1119
        %v1123 = vmul.f32 %v1087, %v1119
        %v1124 = vmul.f32 %v1088, %v1119
        %v1125 = vmul.f32 %v1089, %v1119
        %v1126 = vmul.f32 %v1090, %v1119
        %v1127 = vmul.f32 %v1091, %v1119
        %v1128 = vmul.f32 %v1092, %v1119
        %v1129 = vmul.f32 %v1093, %v1119
        %v1130 = vmul.f32 %v1094, %v1119
        %v1131 = vmul.f32 %v1095, %v1119
        %v1132 = vmul.f32 %v1096, %v1119
        %v1133 = vmul.f32 %v1097, %v1119
        %v1134 = vmul.f32 %v1098, %v1119
        %v1135 = vmul.f32 %v1099, %v1119
        %v1136 = vmul.f32 %v1100, %v1119
        %v1137 = vmul.f32 %v1101, %v1119
        %v1138 = vmul.f32 %v1102, %v1119
        %v1139 = vmul.f32 %v1103, %v1119
        %v1140 = vmul.f32 %v1104, %v1119
        %v1141 = vmul.f32 %v1105, %v1119
        %v1142 = vmul.f32 %v1106, %v1119
        %v1143 = vmul.f32 %v1107, %v1119
        %v1144 = vmul.f32 %v1108, %v1119
        %v1145 = vmul.f32 %v1109, %v1119
        %v1146 = vmul.f32 %v1110, %v1119
        %v1147 = vmul.f32 %v1111, %v1119
        %v1148 = vmul.f32 %v1112, %v1119
        %v1149 = vmul.f32 %v1113, %v1119
        %v1150 = vmul.f32 %v1114, %v1119
        %v1151 = vmul.f32 %v1115, %v1119
        %v1152 = vadd.f32 %v1052, %v1120
        %v1153 = vadd.f32 %v1053, %v1121
        %v1154 = vadd.f32 %v1054, %v1122
        %v1155 = vadd.f32 %v1055, %v1123
        %v1156 = vadd.f32 %v1056, %v1124
        %v1157 = vadd.f32 %v1057, %v1125
        %v1158 = vadd.f32 %v1058, %v1126
        %v1159 = vadd.f32 %v1059, %v1127
        %v1160 = vadd.f32 %v1060, %v1128
        %v1161 = vadd.f32 %v1061, %v1129
        %v1162 = vadd.f32 %v1062, %v1130
        %v1163 = vadd.f32 %v1063, %v1131
        %v1164 = vadd.f32 %v1064, %v1132
        %v1165 = vadd.f32 %v1065, %v1133
        %v1166 = vadd.f32 %v1066, %v1134
        %v1167 = vadd.f32 %v1067, %v1135
        %v1168 = vadd.f32 %v1068, %v1136
        %v1169 = vadd.f32 %v1069, %v1137
        %v1170 = vadd.f32 %v1070, %v1138
        %v1171 = vadd.f32 %v1071, %v1139
        %v1172 = vadd.f32 %v1072, %v1140
        %v1173 = vadd.f32 %v1073, %v1141
        %v1174 = vadd.f32 %v1074, %v1142
        %v1175 = vadd.f32 %v1075, %v1143
        %v1176 = vadd.f32 %v1076, %v1144
        %v1177 = vadd.f32 %v1077, %v1145
        %v1178 = vadd.f32 %v1078, %v1146
        %v1179 = vadd.f32 %v1079, %v1147
        %v1180 = vadd.f32 %v1080, %v1148
        %v1181 = vadd.f32 %v1081, %v1149
        %v1182 = vadd.f32 %v1082, %v1150
        %v1183 = vadd.f32 %v1083, %v1151
        %v1184 = vld [vmem:[%s2] sm:$0x1]
        %v1186 = vlaneseq
        %v1187 = vshrl.u32 %v1186, 7
        %v1188 = vsub.s32 0, %v1187
        %v1189 = vrot.slane %v1184, %v1188
        %v1191 = vadd.f32 %v1152, %v1189
        %v1192 = vadd.f32 %v1153, %v1189
        %v1193 = vadd.f32 %v1154, %v1189
        %v1194 = vadd.f32 %v1155, %v1189
        %v1195 = vadd.f32 %v1156, %v1189
        %v1196 = vadd.f32 %v1157, %v1189
        %v1197 = vadd.f32 %v1158, %v1189
        %v1198 = vadd.f32 %v1159, %v1189
        %v1199 = vadd.f32 %v1160, %v1189
        %v1200 = vadd.f32 %v1161, %v1189
        %v1201 = vadd.f32 %v1162, %v1189
        %v1202 = vadd.f32 %v1163, %v1189
        %v1203 = vadd.f32 %v1164, %v1189
        %v1204 = vadd.f32 %v1165, %v1189
        %v1205 = vadd.f32 %v1166, %v1189
        %v1206 = vadd.f32 %v1167, %v1189
        %v1207 = vadd.f32 %v1168, %v1189
        %v1208 = vadd.f32 %v1169, %v1189
        %v1209 = vadd.f32 %v1170, %v1189
        %v1210 = vadd.f32 %v1171, %v1189
        %v1211 = vadd.f32 %v1172, %v1189
        %v1212 = vadd.f32 %v1173, %v1189
        %v1213 = vadd.f32 %v1174, %v1189
        %v1214 = vadd.f32 %v1175, %v1189
        %v1215 = vadd.f32 %v1176, %v1189
        %v1216 = vadd.f32 %v1177, %v1189
        %v1217 = vadd.f32 %v1178, %v1189
        %v1218 = vadd.f32 %v1179, %v1189
        %v1219 = vadd.f32 %v1180, %v1189
        %v1220 = vadd.f32 %v1181, %v1189
        %v1221 = vadd.f32 %v1182, %v1189
        %v1222 = vadd.f32 %v1183, %v1189
        %v1223 = vmax.f32 %v1191, 0.0
        %v1224 = vmax.f32 %v1192, 0.0
        %v1225 = vmax.f32 %v1193, 0.0
        %v1226 = vmax.f32 %v1194, 0.0
        %v1227 = vmax.f32 %v1195, 0.0
        %v1228 = vmax.f32 %v1196, 0.0
        %v1229 = vmax.f32 %v1197, 0.0
        %v1230 = vmax.f32 %v1198, 0.0
        %v1231 = vmax.f32 %v1199, 0.0
        %v1232 = vmax.f32 %v1200, 0.0
        %v1233 = vmax.f32 %v1201, 0.0
        %v1234 = vmax.f32 %v1202, 0.0
        %v1235 = vmax.f32 %v1203, 0.0
        %v1236 = vmax.f32 %v1204, 0.0
        %v1237 = vmax.f32 %v1205, 0.0
        %v1238 = vmax.f32 %v1206, 0.0
        %v1239 = vmax.f32 %v1207, 0.0
        %v1240 = vmax.f32 %v1208, 0.0
        %v1241 = vmax.f32 %v1209, 0.0
        %v1242 = vmax.f32 %v1210, 0.0
        %v1243 = vmax.f32 %v1211, 0.0
        %v1244 = vmax.f32 %v1212, 0.0
        %v1245 = vmax.f32 %v1213, 0.0
        %v1246 = vmax.f32 %v1214, 0.0
        %v1247 = vmax.f32 %v1215, 0.0
        %v1248 = vmax.f32 %v1216, 0.0
        %v1249 = vmax.f32 %v1217, 0.0
        %v1250 = vmax.f32 %v1218, 0.0
        %v1251 = vmax.f32 %v1219, 0.0
        %v1252 = vmax.f32 %v1220, 0.0
        %v1253 = vmax.f32 %v1221, 0.0
        %v1254 = vmax.f32 %v1222, 0.0
        %vm1255 = vcmask 31744
        %1256 = vst.msk [vmem:[#allocation2] sm:$0xff] %vm1255, %v1223
        %1257 = vst.msk [vmem:[#allocation2 + $0x8] sm:$0xff] %vm1255, %v1224
        %1258 = vst.msk [vmem:[#allocation2 + $0x10] sm:$0xff] %vm1255, %v1225
        %1259 = vst.msk [vmem:[#allocation2 + $0x18] sm:$0xff] %vm1255, %v1226
        %1260 = vst.msk [vmem:[#allocation2 + $0x20] sm:$0xff] %vm1255, %v1227
        %1261 = vst.msk [vmem:[#allocation2 + $0x28] sm:$0xff] %vm1255, %v1228
        %1262 = vst.msk [vmem:[#allocation2 + $0x30] sm:$0xff] %vm1255, %v1229
        %1263 = vst.msk [vmem:[#allocation2 + $0x38] sm:$0xff] %vm1255, %v1230
        %1264 = vst.msk [vmem:[#allocation2 + $0x40] sm:$0xff] %vm1255, %v1231
        %1265 = vst.msk [vmem:[#allocation2 + $0x48] sm:$0xff] %vm1255, %v1232
        %1266 = vst.msk [vmem:[#allocation2 + $0x50] sm:$0xff] %vm1255, %v1233
        %1267 = vst.msk [vmem:[#allocation2 + $0x58] sm:$0xff] %vm1255, %v1234
        %1268 = vst.msk [vmem:[#allocation2 + $0x60] sm:$0xff] %vm1255, %v1235
        %1269 = vst.msk [vmem:[#allocation2 + $0x68] sm:$0xff] %vm1255, %v1236
        %1270 = vst.msk [vmem:[#allocation2 + $0x70] sm:$0xff] %vm1255, %v1237
        %1271 = vst.msk [vmem:[#allocation2 + $0x78] sm:$0xff] %vm1255, %v1238
        %1272 = vst.msk [vmem:[#allocation2 + $0x80] sm:$0xff] %vm1255, %v1239
        %1273 = vst.msk [vmem:[#allocation2 + $0x88] sm:$0xff] %vm1255, %v1240
        %1274 = vst.msk [vmem:[#allocation2 + $0x90] sm:$0xff] %vm1255, %v1241
        %1275 = vst.msk [vmem:[#allocation2 + $0x98] sm:$0xff] %vm1255, %v1242
        %1276 = vst.msk [vmem:[#allocation2 + $0xa0] sm:$0xff] %vm1255, %v1243
        %1277 = vst.msk [vmem:[#allocation2 + $0xa8] sm:$0xff] %vm1255, %v1244
        %1278 = vst.msk [vmem:[#allocation2 + $0xb0] sm:$0xff] %vm1255, %v1245
        %1279 = vst.msk [vmem:[#allocation2 + $0xb8] sm:$0xff] %vm1255, %v1246
        %1280 = vst.msk [vmem:[#allocation2 + $0xc0] sm:$0xff] %vm1255, %v1247
        %1281 = vst.msk [vmem:[#allocation2 + $0xc8] sm:$0xff] %vm1255, %v1248
        %1282 = vst.msk [vmem:[#allocation2 + $0xd0] sm:$0xff] %vm1255, %v1249
        %1283 = vst.msk [vmem:[#allocation2 + $0xd8] sm:$0xff] %vm1255, %v1250
        %1284 = vst.msk [vmem:[#allocation2 + $0xe0] sm:$0xff] %vm1255, %v1251
        %1285 = vst.msk [vmem:[#allocation2 + $0xe8] sm:$0xff] %vm1255, %v1252
        %1286 = vst.msk [vmem:[#allocation2 + $0xf0] sm:$0xff] %vm1255, %v1253
        %1287 = vst.msk [vmem:[#allocation2 + $0xf8] sm:$0xff] %vm1255, %v1254
      $region44: #{tpu_custom_call.1} parent=39 // pred_fallthru
        _
      %v1288 = vld [vmem:[#allocation2] sm:$0xff]
      %v1289 = vld [vmem:[#allocation2 + $0x8] sm:$0xff]
      %v1290 = vld [vmem:[#allocation2 + $0x10] sm:$0xff]
      %v1291 = vld [vmem:[#allocation2 + $0x18] sm:$0xff]
      %v1292 = vld [vmem:[#allocation2 + $0x20] sm:$0xff]
      %v1293 = vld [vmem:[#allocation2 + $0x28] sm:$0xff]
      %v1294 = vld [vmem:[#allocation2 + $0x30] sm:$0xff]
      %v1295 = vld [vmem:[#allocation2 + $0x38] sm:$0xff]
      %v1296 = vld [vmem:[#allocation2 + $0x40] sm:$0xff]
      %v1297 = vld [vmem:[#allocation2 + $0x48] sm:$0xff]
      %v1298 = vld [vmem:[#allocation2 + $0x50] sm:$0xff]
      %v1299 = vld [vmem:[#allocation2 + $0x58] sm:$0xff]
      %v1300 = vld [vmem:[#allocation2 + $0x60] sm:$0xff]
      %v1301 = vld [vmem:[#allocation2 + $0x68] sm:$0xff]
      %v1302 = vld [vmem:[#allocation2 + $0x70] sm:$0xff]
      %v1303 = vld [vmem:[#allocation2 + $0x78] sm:$0xff]
      %v1304 = vld [vmem:[#allocation2 + $0x80] sm:$0xff]
      %v1305 = vld [vmem:[#allocation2 + $0x88] sm:$0xff]
      %v1306 = vld [vmem:[#allocation2 + $0x90] sm:$0xff]
      %v1307 = vld [vmem:[#allocation2 + $0x98] sm:$0xff]
      %v1308 = vld [vmem:[#allocation2 + $0xa0] sm:$0xff]
      %v1309 = vld [vmem:[#allocation2 + $0xa8] sm:$0xff]
      %v1310 = vld [vmem:[#allocation2 + $0xb0] sm:$0xff]
      %v1311 = vld [vmem:[#allocation2 + $0xb8] sm:$0xff]
      %v1312 = vld [vmem:[#allocation2 + $0xc0] sm:$0xff]
      %v1313 = vld [vmem:[#allocation2 + $0xc8] sm:$0xff]
      %v1314 = vld [vmem:[#allocation2 + $0xd0] sm:$0xff]
      %v1315 = vld [vmem:[#allocation2 + $0xd8] sm:$0xff]
      %v1316 = vld [vmem:[#allocation2 + $0xe0] sm:$0xff]
      %v1317 = vld [vmem:[#allocation2 + $0xe8] sm:$0xff]
      %v1318 = vld [vmem:[#allocation2 + $0xf0] sm:$0xff]
      %v1319 = vld [vmem:[#allocation2 + $0xf8] sm:$0xff]
      %v1320 = vld [vmem:[%s264] sm:$0xf]
      %v1321 = vld [vmem:[%s267] sm:$0x1]
      %v1323 = vlaneseq
      %v1324 = vshrl.u32 %v1323, 7
      %v1325 = vsub.s32 0, %v1324
      %v1326 = vrot.slane %v1321, %v1325
      %vm1328 = vcmask 31744
      %v1330 = vsel %vm1328, %v1288, 0
      %v1333 = vsel %vm1328, %v1289, 0
      %v1336 = vsel %vm1328, %v1290, 0
      %v1339 = vsel %vm1328, %v1291, 0
      %v1342 = vsel %vm1328, %v1292, 0
      %v1345 = vsel %vm1328, %v1293, 0
      %v1348 = vsel %vm1328, %v1294, 0
      %v1351 = vsel %vm1328, %v1295, 0
      %v1354 = vsel %vm1328, %v1296, 0
      %v1357 = vsel %vm1328, %v1297, 0
      %v1360 = vsel %vm1328, %v1298, 0
      %v1363 = vsel %vm1328, %v1299, 0
      %v1366 = vsel %vm1328, %v1300, 0
      %v1369 = vsel %vm1328, %v1301, 0
      %v1372 = vsel %vm1328, %v1302, 0
      %v1375 = vsel %vm1328, %v1303, 0
      %v1378 = vsel %vm1328, %v1304, 0
      %v1381 = vsel %vm1328, %v1305, 0
      %v1384 = vsel %vm1328, %v1306, 0
      %v1387 = vsel %vm1328, %v1307, 0
      %v1390 = vsel %vm1328, %v1308, 0
      %v1393 = vsel %vm1328, %v1309, 0
      %v1396 = vsel %vm1328, %v1310, 0
      %v1399 = vsel %vm1328, %v1311, 0
      %v1402 = vsel %vm1328, %v1312, 0
      %v1405 = vsel %vm1328, %v1313, 0
      %v1408 = vsel %vm1328, %v1314, 0
      %v1411 = vsel %vm1328, %v1315, 0
      %v1414 = vsel %vm1328, %v1316, 0
      %v1417 = vsel %vm1328, %v1317, 0
      %v1420 = vsel %vm1328, %v1318, 0
      %v1423 = vsel %vm1328, %v1319, 0
      %vm1425 = vcmask 1043456
      %v1427 = vsel %vm1425, %v1320, 0
      %1429 = vmatprep.subr.mxu0 0.0
      %1430 = vmatpush1.msra.mxu0 0.0
      %1431 = vmatprep.subr.mxu0 0.0
      %1432 = vmatpush1.msra.mxu0 0.0
      %1433 = vmatprep.subr.mxu0 0.0
      %1434 = vmatpush1.msra.mxu0 0.0
      %1435 = vmatprep.subr.mxu0 0.0
      %1436 = vmatpush1.msra.mxu0 0.0
      %1437 = vmatprep.subr.mxu0 0.0
      %1438 = vmatpush1.msra.mxu0 0.0
      %1439 = vmatprep.subr.mxu0 0.0
      %1440 = vmatpush1.msra.mxu0 0.0
      %1441 = vmatprep.subr.mxu0 0.0
      %1442 = vmatpush1.msra.mxu0 0.0
      %1443 = vmatprep.subr.mxu0 0.0
      %1444 = vmatpush1.msra.mxu0 0.0
      %1445 = vmatprep.subr.mxu0 0.0
      %1446 = vmatpush1.msra.mxu0 0.0
      %1447 = vmatprep.subr.mxu0 0.0
      %1448 = vmatpush1.msra.mxu0 0.0
      %1449 = vmatprep.subr.mxu0 0.0
      %1450 = vmatpush1.msra.mxu0 0.0
      %1451 = vmatprep.subr.mxu0 0.0
      %1452 = vmatpush1.msra.mxu0 0.0
      %1453 = vmatprep.subr.mxu0 0.0
      %1454 = vmatpush1.msra.mxu0 0.0
      %1455 = vmatprep.subr.mxu0 0.0
      %1456 = vmatpush1.msra.mxu0 0.0
      %1457 = vmatprep.subr.mxu0 0.0
      %1458 = vmatpush1.msra.mxu0 0.0
      %1459 = vmatprep.subr.mxu0 0.0
      %1460 = vmatpush1.msra.mxu0 %v1427
      %1461 = vmatprep.subr.mxu0 0.0
      %1462 = vmatpush2.msra.mxu0 0.0
      %1463 = vmatprep.subr.mxu0 0.0
      %1464 = vmatpush2.msra.mxu0 0.0
      %1465 = vmatprep.subr.mxu0 0.0
      %1466 = vmatpush2.msra.mxu0 0.0
      %1467 = vmatprep.subr.mxu0 0.0
      %1468 = vmatpush2.msra.mxu0 0.0
      %1469 = vmatprep.subr.mxu0 0.0
      %1470 = vmatpush2.msra.mxu0 0.0
      %1471 = vmatprep.subr.mxu0 0.0
      %1472 = vmatpush2.msra.mxu0 0.0
      %1473 = vmatprep.subr.mxu0 0.0
      %1474 = vmatpush2.msra.mxu0 0.0
      %1475 = vmatprep.subr.mxu0 0.0
      %1476 = vmatpush2.msra.mxu0 0.0
      %1477 = vmatprep.subr.mxu0 0.0
      %1478 = vmatpush2.msra.mxu0 0.0
      %1479 = vmatprep.subr.mxu0 0.0
      %1480 = vmatpush2.msra.mxu0 0.0
      %1481 = vmatprep.subr.mxu0 0.0
      %1482 = vmatpush2.msra.mxu0 0.0
      %1483 = vmatprep.subr.mxu0 0.0
      %1484 = vmatpush2.msra.mxu0 0.0
      %1485 = vmatprep.subr.mxu0 0.0
      %1486 = vmatpush2.msra.mxu0 0.0
      %1487 = vmatprep.subr.mxu0 0.0
      %1488 = vmatpush2.msra.mxu0 0.0
      %1489 = vmatprep.subr.mxu0 0.0
      %1490 = vmatpush2.msra.mxu0 0.0
      %1491 = vmatprep.subr.mxu0 0.0
      %1492 = vmatpush2.msra.mxu0 0.0
      %1493 = vmatprep.mubr.f32.mxu0 0.0
      %1494 = vmatmul.mubr.f32.gmra.mxu0 %v1330
      %v1495 = vpop.f32.mrf.mxu0
      %v1496 = vadd.f32 %v1326, %v1495
      %v1497 = vpop.f32.mrf.mxu0
      %1498 = vmatprep.mubr.f32.mxu0 0.0
      %1499 = vmatmul.mubr.f32.gmra.mxu0 %v1333
      %v1500 = vpop.f32.mrf.mxu0
      %v1501 = vadd.f32 %v1326, %v1500
      %v1502 = vpop.f32.mrf.mxu0
      %1503 = vmatprep.mubr.f32.mxu0 0.0
      %1504 = vmatmul.mubr.f32.gmra.mxu0 %v1336
      %v1505 = vpop.f32.mrf.mxu0
      %v1506 = vadd.f32 %v1326, %v1505
      %v1507 = vpop.f32.mrf.mxu0
      %1508 = vmatprep.mubr.f32.mxu0 0.0
      %1509 = vmatmul.mubr.f32.gmra.mxu0 %v1339
      %v1510 = vpop.f32.mrf.mxu0
      %v1511 = vadd.f32 %v1326, %v1510
      %v1512 = vpop.f32.mrf.mxu0
      %1513 = vmatprep.mubr.f32.mxu0 0.0
      %1514 = vmatmul.mubr.f32.gmra.mxu0 %v1342
      %v1515 = vpop.f32.mrf.mxu0
      %v1516 = vadd.f32 %v1326, %v1515
      %v1517 = vpop.f32.mrf.mxu0
      %1518 = vmatprep.mubr.f32.mxu0 0.0
      %1519 = vmatmul.mubr.f32.gmra.mxu0 %v1345
      %v1520 = vpop.f32.mrf.mxu0
      %v1521 = vadd.f32 %v1326, %v1520
      %v1522 = vpop.f32.mrf.mxu0
      %1523 = vmatprep.mubr.f32.mxu0 0.0
      %1524 = vmatmul.mubr.f32.gmra.mxu0 %v1348
      %v1525 = vpop.f32.mrf.mxu0
      %v1526 = vadd.f32 %v1326, %v1525
      %v1527 = vpop.f32.mrf.mxu0
      %1528 = vmatprep.mubr.f32.mxu0 0.0
      %1529 = vmatmul.mubr.f32.gmra.mxu0 %v1351
      %v1530 = vpop.f32.mrf.mxu0
      %v1531 = vadd.f32 %v1326, %v1530
      %v1532 = vpop.f32.mrf.mxu0
      %1533 = vmatprep.mubr.f32.mxu0 0.0
      %1534 = vmatmul.mubr.f32.gmra.mxu0 %v1354
      %v1535 = vpop.f32.mrf.mxu0
      %v1536 = vadd.f32 %v1326, %v1535
      %v1537 = vpop.f32.mrf.mxu0
      %1538 = vmatprep.mubr.f32.mxu0 0.0
      %1539 = vmatmul.mubr.f32.gmra.mxu0 %v1357
      %v1540 = vpop.f32.mrf.mxu0
      %v1541 = vadd.f32 %v1326, %v1540
      %v1542 = vpop.f32.mrf.mxu0
      %1543 = vmatprep.mubr.f32.mxu0 0.0
      %1544 = vmatmul.mubr.f32.gmra.mxu0 %v1360
      %v1545 = vpop.f32.mrf.mxu0
      %v1546 = vadd.f32 %v1326, %v1545
      %v1547 = vpop.f32.mrf.mxu0
      %1548 = vmatprep.mubr.f32.mxu0 0.0
      %1549 = vmatmul.mubr.f32.gmra.mxu0 %v1363
      %v1550 = vpop.f32.mrf.mxu0
      %v1551 = vadd.f32 %v1326, %v1550
      %v1552 = vpop.f32.mrf.mxu0
      %1553 = vmatprep.mubr.f32.mxu0 0.0
      %1554 = vmatmul.mubr.f32.gmra.mxu0 %v1366
      %v1555 = vpop.f32.mrf.mxu0
      %v1556 = vadd.f32 %v1326, %v1555
      %v1557 = vpop.f32.mrf.mxu0
      %1558 = vmatprep.mubr.f32.mxu0 0.0
      %1559 = vmatmul.mubr.f32.gmra.mxu0 %v1369
      %v1560 = vpop.f32.mrf.mxu0
      %v1561 = vadd.f32 %v1326, %v1560
      %v1562 = vpop.f32.mrf.mxu0
      %1563 = vmatprep.mubr.f32.mxu0 0.0
      %1564 = vmatmul.mubr.f32.gmra.mxu0 %v1372
      %v1565 = vpop.f32.mrf.mxu0
      %v1566 = vadd.f32 %v1326, %v1565
      %v1567 = vpop.f32.mrf.mxu0
      %1568 = vmatprep.mubr.f32.mxu0 0.0
      %1569 = vmatmul.mubr.f32.gmra.mxu0 %v1375
      %v1570 = vpop.f32.mrf.mxu0
      %v1571 = vadd.f32 %v1326, %v1570
      %v1572 = vpop.f32.mrf.mxu0
      %1573 = vmatprep.mubr.f32.mxu0 0.0
      %1574 = vmatmul.mubr.f32.gmra.mxu0 %v1378
      %v1575 = vpop.f32.mrf.mxu0
      %v1576 = vadd.f32 %v1326, %v1575
      %v1577 = vpop.f32.mrf.mxu0
      %1578 = vmatprep.mubr.f32.mxu0 0.0
      %1579 = vmatmul.mubr.f32.gmra.mxu0 %v1381
      %v1580 = vpop.f32.mrf.mxu0
      %v1581 = vadd.f32 %v1326, %v1580
      %v1582 = vpop.f32.mrf.mxu0
      %1583 = vmatprep.mubr.f32.mxu0 0.0
      %1584 = vmatmul.mubr.f32.gmra.mxu0 %v1384
      %v1585 = vpop.f32.mrf.mxu0
      %v1586 = vadd.f32 %v1326, %v1585
      %v1587 = vpop.f32.mrf.mxu0
      %1588 = vmatprep.mubr.f32.mxu0 0.0
      %1589 = vmatmul.mubr.f32.gmra.mxu0 %v1387
      %v1590 = vpop.f32.mrf.mxu0
      %v1591 = vadd.f32 %v1326, %v1590
      %v1592 = vpop.f32.mrf.mxu0
      %1593 = vmatprep.mubr.f32.mxu0 0.0
      %1594 = vmatmul.mubr.f32.gmra.mxu0 %v1390
      %v1595 = vpop.f32.mrf.mxu0
      %v1596 = vadd.f32 %v1326, %v1595
      %v1597 = vpop.f32.mrf.mxu0
      %1598 = vmatprep.mubr.f32.mxu0 0.0
      %1599 = vmatmul.mubr.f32.gmra.mxu0 %v1393
      %v1600 = vpop.f32.mrf.mxu0
      %v1601 = vadd.f32 %v1326, %v1600
      %v1602 = vpop.f32.mrf.mxu0
      %1603 = vmatprep.mubr.f32.mxu0 0.0
      %1604 = vmatmul.mubr.f32.gmra.mxu0 %v1396
      %v1605 = vpop.f32.mrf.mxu0
      %v1606 = vadd.f32 %v1326, %v1605
      %v1607 = vpop.f32.mrf.mxu0
      %1608 = vmatprep.mubr.f32.mxu0 0.0
      %1609 = vmatmul.mubr.f32.gmra.mxu0 %v1399
      %v1610 = vpop.f32.mrf.mxu0
      %v1611 = vadd.f32 %v1326, %v1610
      %v1612 = vpop.f32.mrf.mxu0
      %1613 = vmatprep.mubr.f32.mxu0 0.0
      %1614 = vmatmul.mubr.f32.gmra.mxu0 %v1402
      %v1615 = vpop.f32.mrf.mxu0
      %v1616 = vadd.f32 %v1326, %v1615
      %v1617 = vpop.f32.mrf.mxu0
      %1618 = vmatprep.mubr.f32.mxu0 0.0
      %1619 = vmatmul.mubr.f32.gmra.mxu0 %v1405
      %v1620 = vpop.f32.mrf.mxu0
      %v1621 = vadd.f32 %v1326, %v1620
      %v1622 = vpop.f32.mrf.mxu0
      %1623 = vmatprep.mubr.f32.mxu0 0.0
      %1624 = vmatmul.mubr.f32.gmra.mxu0 %v1408
      %v1625 = vpop.f32.mrf.mxu0
      %v1626 = vadd.f32 %v1326, %v1625
      %v1627 = vpop.f32.mrf.mxu0
      %1628 = vmatprep.mubr.f32.mxu0 0.0
      %1629 = vmatmul.mubr.f32.gmra.mxu0 %v1411
      %v1630 = vpop.f32.mrf.mxu0
      %v1631 = vadd.f32 %v1326, %v1630
      %v1632 = vpop.f32.mrf.mxu0
      %1633 = vmatprep.mubr.f32.mxu0 0.0
      %1634 = vmatmul.mubr.f32.gmra.mxu0 %v1414
      %v1635 = vpop.f32.mrf.mxu0
      %v1636 = vadd.f32 %v1326, %v1635
      %v1637 = vpop.f32.mrf.mxu0
      %1638 = vmatprep.mubr.f32.mxu0 0.0
      %1639 = vmatmul.mubr.f32.gmra.mxu0 %v1417
      %v1640 = vpop.f32.mrf.mxu0
      %v1641 = vadd.f32 %v1326, %v1640
      %v1642 = vpop.f32.mrf.mxu0
      %1643 = vmatprep.mubr.f32.mxu0 0.0
      %1644 = vmatmul.mubr.f32.gmra.mxu0 %v1420
      %v1645 = vpop.f32.mrf.mxu0
      %v1646 = vadd.f32 %v1326, %v1645
      %v1647 = vpop.f32.mrf.mxu0
      %1648 = vmatprep.mubr.f32.mxu0 0.0
      %1649 = vmatmul.mubr.f32.gmra.mxu0 %v1423
      %v1650 = vpop.f32.mrf.mxu0
      %v1651 = vadd.f32 %v1326, %v1650
      %v1652 = vpop.f32.mrf.mxu0
      %1653 = vdwg.mxu0
      %v1654 = vmax.f32 %v1496, 0.0
      %v1655 = vmax.f32 %v1501, 0.0
      %v1656 = vmax.f32 %v1506, 0.0
      %v1657 = vmax.f32 %v1511, 0.0
      %v1658 = vmax.f32 %v1516, 0.0
      %v1659 = vmax.f32 %v1521, 0.0
      %v1660 = vmax.f32 %v1526, 0.0
      %v1661 = vmax.f32 %v1531, 0.0
      %v1662 = vmax.f32 %v1536, 0.0
      %v1663 = vmax.f32 %v1541, 0.0
      %v1664 = vmax.f32 %v1546, 0.0
      %v1665 = vmax.f32 %v1551, 0.0
      %v1666 = vmax.f32 %v1556, 0.0
      %v1667 = vmax.f32 %v1561, 0.0
      %v1668 = vmax.f32 %v1566, 0.0
      %v1669 = vmax.f32 %v1571, 0.0
      %v1670 = vmax.f32 %v1576, 0.0
      %v1671 = vmax.f32 %v1581, 0.0
      %v1672 = vmax.f32 %v1586, 0.0
      %v1673 = vmax.f32 %v1591, 0.0
      %v1674 = vmax.f32 %v1596, 0.0
      %v1675 = vmax.f32 %v1601, 0.0
      %v1676 = vmax.f32 %v1606, 0.0
      %v1677 = vmax.f32 %v1611, 0.0
      %v1678 = vmax.f32 %v1616, 0.0
      %v1679 = vmax.f32 %v1621, 0.0
      %v1680 = vmax.f32 %v1626, 0.0
      %v1681 = vmax.f32 %v1631, 0.0
      %v1682 = vmax.f32 %v1636, 0.0
      %v1683 = vmax.f32 %v1641, 0.0
      %v1684 = vmax.f32 %v1646, 0.0
      %v1685 = vmax.f32 %v1651, 0.0
      %vm1686 = vcmask 64512
      %1687 = vst.msk [vmem:[%s275] sm:$0xff] %vm1686, %v1654
      %1688 = vst.msk [vmem:[%s275 + $0x8] sm:$0xff] %vm1686, %v1655
      %1689 = vst.msk [vmem:[%s275 + $0x10] sm:$0xff] %vm1686, %v1656
      %1690 = vst.msk [vmem:[%s275 + $0x18] sm:$0xff] %vm1686, %v1657
      %1691 = vst.msk [vmem:[%s275 + $0x20] sm:$0xff] %vm1686, %v1658
      %1692 = vst.msk [vmem:[%s275 + $0x28] sm:$0xff] %vm1686, %v1659
      %1693 = vst.msk [vmem:[%s275 + $0x30] sm:$0xff] %vm1686, %v1660
      %1694 = vst.msk [vmem:[%s275 + $0x38] sm:$0xff] %vm1686, %v1661
      %1695 = vst.msk [vmem:[%s275 + $0x40] sm:$0xff] %vm1686, %v1662
      %1696 = vst.msk [vmem:[%s275 + $0x48] sm:$0xff] %vm1686, %v1663
      %1697 = vst.msk [vmem:[%s275 + $0x50] sm:$0xff] %vm1686, %v1664
      %1698 = vst.msk [vmem:[%s275 + $0x58] sm:$0xff] %vm1686, %v1665
      %1699 = vst.msk [vmem:[%s275 + $0x60] sm:$0xff] %vm1686, %v1666
      %1700 = vst.msk [vmem:[%s275 + $0x68] sm:$0xff] %vm1686, %v1667
      %1701 = vst.msk [vmem:[%s275 + $0x70] sm:$0xff] %vm1686, %v1668
      %1702 = vst.msk [vmem:[%s275 + $0x78] sm:$0xff] %vm1686, %v1669
      %1703 = vst.msk [vmem:[%s275 + $0x80] sm:$0xff] %vm1686, %v1670
      %1704 = vst.msk [vmem:[%s275 + $0x88] sm:$0xff] %vm1686, %v1671
      %1705 = vst.msk [vmem:[%s275 + $0x90] sm:$0xff] %vm1686, %v1672
      %1706 = vst.msk [vmem:[%s275 + $0x98] sm:$0xff] %vm1686, %v1673
      %1707 = vst.msk [vmem:[%s275 + $0xa0] sm:$0xff] %vm1686, %v1674
      %1708 = vst.msk [vmem:[%s275 + $0xa8] sm:$0xff] %vm1686, %v1675
      %1709 = vst.msk [vmem:[%s275 + $0xb0] sm:$0xff] %vm1686, %v1676
      %1710 = vst.msk [vmem:[%s275 + $0xb8] sm:$0xff] %vm1686, %v1677
      %1711 = vst.msk [vmem:[%s275 + $0xc0] sm:$0xff] %vm1686, %v1678
      %1712 = vst.msk [vmem:[%s275 + $0xc8] sm:$0xff] %vm1686, %v1679
      %1713 = vst.msk [vmem:[%s275 + $0xd0] sm:$0xff] %vm1686, %v1680
      %1714 = vst.msk [vmem:[%s275 + $0xd8] sm:$0xff] %vm1686, %v1681
      %1715 = vst.msk [vmem:[%s275 + $0xe0] sm:$0xff] %vm1686, %v1682
      %1716 = vst.msk [vmem:[%s275 + $0xe8] sm:$0xff] %vm1686, %v1683
      %1717 = vst.msk [vmem:[%s275 + $0xf0] sm:$0xff] %vm1686, %v1684
      %1718 = vst.msk [vmem:[%s275 + $0xf8] sm:$0xff] %vm1686, %v1685
      %p1719 = scmp.lt.s32.totalorder %s20, 1
      %s1720 = scalar_select %p1719, %s20, 1
      %p1721 = scmp.lt.s32.totalorder %s21, 0
      %s1722 = scalar_select %p1721, %s21, 0
      %s1723 = smul.addr %s1720, 32
      %s1724 = sadd.s32 %s1722, %s1723
      %s1725 = smul.addr %s1724, 8
      %s1726 = scalar_lea.vmem %s5, %s1725
      // Predicated region
      $region45: #{tpu_custom_call.1} parent=39 // pred_check
        %p1727 = pneg %p168
      $region46: #{tpu_custom_call.1} parent=39 // pred_check_branch
        %1729 = sbr.rel (%p1727) target = $region48
      $region47: #{tpu_custom_call.1} parent=39 // pred_region
        _
      $region48: #{tpu_custom_call.1} parent=39 // pred_fallthru
        _
    $region40: #{tpu_custom_call.1} parent=5 // pred_fallthru
      _
    %p1730 = scmp.le.s32.totalorder 2, %s11
    // Predicated region
    $region49: #{tpu_custom_call.1} parent=5 // pred_check
      %p1731 = pneg %p1730
    $region50: #{tpu_custom_call.1} parent=5 // pred_check_branch
      %1733 = sbr.rel (%p1731) target = $region52
    $region51: #{tpu_custom_call.1} parent=5 // pred_region
      %s1734 = ssub.s32 %s11, 2
      // Predicated region
      $region53: #{tpu_custom_call.1} parent=51 // pred_check
        %p1735 = pneg %p174
      $region54: #{tpu_custom_call.1} parent=51 // pred_check_branch
        %1737 = sbr.rel (%p1735) target = $region56
      $region55: #{tpu_custom_call.1} parent=51 // pred_region
        %p1738 = scmp.lt.s32.totalorder %s22, 1
        %s1739 = scalar_select %p1738, %s22, 1
        %p1740 = scmp.lt.s32.totalorder %s23, 0
        %s1741 = scalar_select %p1740, %s23, 0
        %s1742 = smul.addr %s1739, 32
        %s1743 = sadd.s32 %s1741, %s1742
        %s1744 = smul.addr %s1743, 8
        %s1745 = scalar_lea.vmem %s5, %s1744
      $region56: #{tpu_custom_call.1} parent=51 // pred_fallthru
        _
    $region52: #{tpu_custom_call.1} parent=5 // pred_fallthru
      _
  $region6: #{tpu_custom_call.1} parent=0 // loop_footer
    %s15 = sadd.s32 1, %s11
  $region7: #{tpu_custom_call.1} parent=0 // loop_footer_branch
    %10 = sbr.rel target = $region3
  $region8: #{tpu_custom_call.1} parent=0 // loop_exit
    _

</llo_original>
